<compile_context>
chip_gen: v5e
topology: v5e:2x2
jax: 0.10.0
libtpu: 0.0.40
codegen_flags: <defaults>
</compile_context>

<pallas_src>
import functools

import jax
import jax.numpy as jnp
from jax.experimental import pallas as pl
from jax.experimental.pallas import tpu as pltpu


def _round_up(x, m):
    return (x + m - 1) // m * m


def _pick_vocab_tile(vp, max_tile=2048):
    tv = min(vp, max_tile)
    while vp % tv != 0:
        tv -= 128
    return tv


def _decoder_step_kernel(tok_ref, emb_ref, w_ref, b_ref, h0_ref, c0_ref,
                         wout_ref, bout_ref,
                         logp_ref, hn_ref, cn_ref,
                         xh_scr, logits_scr,
                         *, L, NV, TV, Hp):
    t = pl.program_id(0)

    # ---- step 0: embedding row (gathered by BlockSpec via token id) + ReLU ----
    @pl.when(t == 0)
    def _embed():
        xh_scr[:, :Hp] = jnp.maximum(emb_ref[...].astype(jnp.float32), 0.0)

    # ---- layer steps: one LSTM layer per grid step (weights streamed) ----
    @pl.when(t < L)
    def _layer():
        c = c0_ref[...].astype(jnp.float32)                    # (1, Hp)
        xh_scr[:, Hp:] = h0_ref[...].astype(jnp.float32)       # this layer's h_{t-1}
        xh = xh_scr[...].astype(w_ref.dtype)                   # (1, 2Hp) bf16
        gates = (jnp.dot(xh, w_ref[...], preferred_element_type=jnp.float32)
                 + b_ref[...])                                 # (1, 4Hp) f32
        i_g = jax.nn.sigmoid(gates[:, 0 * Hp:1 * Hp])
        f_g = jax.nn.sigmoid(gates[:, 1 * Hp:2 * Hp])
        g_g = jnp.tanh(gates[:, 2 * Hp:3 * Hp])
        o_g = jax.nn.sigmoid(gates[:, 3 * Hp:4 * Hp])
        c_new = f_g * c + i_g * g_g
        h_new = o_g * jnp.tanh(c_new)
        hn_ref[...] = h_new
        cn_ref[...] = c_new
        xh_scr[:, :Hp] = h_new          # input to next layer / final projection

    # ---- projection steps: one vocab tile per grid step (w_out streamed) ----
    @pl.when(t >= L)
    def _proj():
        v = t - L
        xb = xh_scr[:, :Hp].astype(wout_ref.dtype)             # (1, Hp) bf16
        tile = (jnp.dot(xb, wout_ref[...], preferred_element_type=jnp.float32)
                + bout_ref[...])                               # (1, TV) f32
        logits_scr[:, pl.ds(pl.multiple_of(v * TV, TV), TV)] = tile

    # ---- final step: log-softmax over the full (padded) vocab ----
    @pl.when(t == L + NV - 1)
    def _finalize():
        logits = logits_scr[...]
        m = jnp.max(logits, axis=1, keepdims=True)
        s = logits - m
        lse = jnp.log(jnp.sum(jnp.exp(s), axis=1, keepdims=True))
        logp_ref[...] = s - lse


@functools.partial(jax.jit, static_argnames=("out_size",))
def decoder_rnn_forward(token, params, hidden, *, out_size):
    """One decoder step. Returns (log_probs [1, out_size], (h_n, c_n) [L,1,Hp])."""
    h0, c0 = hidden
    L, _, Hp = h0.shape
    Vp = params["w_out"].shape[1]
    TV = _pick_vocab_tile(Vp)
    NV = Vp // TV
    T = L + NV

    tok = jnp.asarray(token, jnp.int32).reshape((1,))

    grid_spec = pltpu.PrefetchScalarGridSpec(
        num_scalar_prefetch=1,
        grid=(T,),
        in_specs=[
            # embedding row gather: block row index = token id (fetched once).
            pl.BlockSpec((None, 1, Hp), lambda t, tok: (tok[0], 0, 0)),
            # fused per-layer LSTM weight [2Hp, 4Hp]: streamed, double-buffered.
            pl.BlockSpec((None, 2 * Hp, 4 * Hp),
                         lambda t, tok: (jnp.minimum(t, L - 1), 0, 0)),
            # combined bias (f32).
            pl.BlockSpec((None, 1, 4 * Hp),
                         lambda t, tok: (jnp.minimum(t, L - 1), 0, 0)),
            # previous hidden / cell state of the current layer.
            pl.BlockSpec((None, 1, Hp),
                         lambda t, tok: (jnp.minimum(t, L - 1), 0, 0)),
            pl.BlockSpec((None, 1, Hp),
                         lambda t, tok: (jnp.minimum(t, L - 1), 0, 0)),
            # output projection weight / bias, streamed over vocab tiles.
            pl.BlockSpec((Hp, TV), lambda t, tok: (0, jnp.maximum(t - L, 0))),
            pl.BlockSpec((1, TV), lambda t, tok: (0, jnp.maximum(t - L, 0))),
        ],
        out_specs=(
            pl.BlockSpec((1, Vp), lambda t, tok: (0, 0)),
            pl.BlockSpec((None, 1, Hp), lambda t, tok: (jnp.minimum(t, L - 1), 0, 0)),
            pl.BlockSpec((None, 1, Hp), lambda t, tok: (jnp.minimum(t, L - 1), 0, 0)),
        ),
        scratch_shapes=[
            pltpu.VMEM((1, 2 * Hp), jnp.float32),   # [x ; h] carry between layers
            pltpu.VMEM((1, Vp), jnp.float32),       # logits accumulator
        ],
    )

    kernel = functools.partial(_decoder_step_kernel, L=L, NV=NV, TV=TV, Hp=Hp)

    # VMEM budget: 2x (fused layer weight + w_out tile) in bf16 + small f32 state.
    # Cap at 64 MiB so the same plan fits v7x (64 MiB VMEM) as well as v5e/v6e.
    est = (2 * (2 * Hp * 4 * Hp * 2 + Hp * TV * 2)
           + 4 * (Vp + 16 * Hp + 4 * Hp) * 4 + (4 << 20))
    vmem_limit = int(min(max(est, 32 * 1024 * 1024), 64 * 1024 * 1024))

    logp_full, h_n, c_n = pl.pallas_call(
        kernel,
        grid_spec=grid_spec,
        out_shape=(
            jax.ShapeDtypeStruct((1, Vp), jnp.float32),
            jax.ShapeDtypeStruct((L, 1, Hp), jnp.float32),
            jax.ShapeDtypeStruct((L, 1, Hp), jnp.float32),
        ),
        compiler_params=pltpu.CompilerParams(
            dimension_semantics=("arbitrary",),
            vmem_limit_bytes=vmem_limit,
        ),
    )(tok, params["embedding"], params["w"], params["b"], h0, c0,
      params["w_out"], params["b_out"])

    return logp_full[:, :out_size], (h_n, c_n)


def init_params(key, hidden_size, output_size, num_layers):
    """Builds padded, pre-fused, bf16 weights matching nn.Embedding/nn.LSTM/nn.Linear."""
    H, V, L = hidden_size, output_size, num_layers
    Hp = _round_up(H, 128)
    Vp = _round_up(V, 128)
    ks = jax.random.split(key, 6)
    u = lambda k, shape: jax.random.uniform(k, shape, jnp.float32, -0.08, 0.08)

    # Embedding (V, H) stored as (V, 1, Hp) with zero feature padding.
    emb = jnp.zeros((V, 1, Hp), jnp.float32).at[:, 0, :H].set(u(ks[0], (V, H)))

    # Fused LSTM weight per layer: rows [0:Hp] = W_ih^T, [Hp:2Hp] = W_hh^T;
    # gate g occupies lane-aligned columns [g*Hp, g*Hp+H). Padding is zero so
    # padded h/c lanes stay exactly zero.
    w = jnp.zeros((L, 2 * Hp, 4 * Hp), jnp.float32)
    w_ih = u(ks[1], (L, H, 4, H))         # [layer, in, gate, out]
    w_hh = u(ks[2], (L, H, 4, H))
    b = jnp.zeros((L, 1, 4 * Hp), jnp.float32)
    b_sum = u(ks[3], (L, 4, H)) + u(ks[4], (L, 4, H))   # b_ih + b_hh
    for g in range(4):
        w = w.at[:, :H, g * Hp:g * Hp + H].set(w_ih[:, :, g, :])
        w = w.at[:, Hp:Hp + H, g * Hp:g * Hp + H].set(w_hh[:, :, g, :])
        b = b.at[:, 0, g * Hp:g * Hp + H].set(b_sum[:, g, :])

    # Output projection: weight (Hp, Vp) transposed layout; padded vocab columns
    # get bias -1e30 so log-softmax ignores them.
    w_out = jnp.zeros((Hp, Vp), jnp.float32).at[:H, :V].set(u(ks[5], (H, V)))
    b_out = jnp.full((1, Vp), -1e30, jnp.float32).at[:, :V].set(0.0)

    params = {
        "embedding": emb.astype(jnp.bfloat16),
        "w": w.astype(jnp.bfloat16),
        "b": b,                               # f32
        "w_out": w_out.astype(jnp.bfloat16),
        "b_out": b_out,                       # f32
    }
    return params, Hp, Vp


def _reference_forward(token, params, hidden, out_size, Hp):
    """Pure-JAX reference using the same bf16 weights (f32 accumulation)."""
    h0, c0 = hidden
    L = h0.shape[0]
    x = jnp.maximum(params["embedding"].astype(jnp.float32)[token, 0], 0.0)[None, :]
    w = params["w"].astype(jnp.float32)
    hs, cs = [], []
    for l in range(L):
        h, c = h0[l], c0[l]
        xh = jnp.concatenate([x, h], axis=1)
        xh = xh.astype(jnp.bfloat16).astype(jnp.float32)   # match kernel's bf16 feed
        gates = jnp.dot(xh, w[l], precision=jax.lax.Precision.HIGHEST) + params["b"][l]
        i_g = jax.nn.sigmoid(gates[:, 0 * Hp:1 * Hp])
        f_g = jax.nn.sigmoid(gates[:, 1 * Hp:2 * Hp])
        g_g = jnp.tanh(gates[:, 2 * Hp:3 * Hp])
        o_g = jax.nn.sigmoid(gates[:, 3 * Hp:4 * Hp])
        c_new = f_g * c + i_g * g_g
        h_new = o_g * jnp.tanh(c_new)
        hs.append(h_new)
        cs.append(c_new)
        x = h_new
    xb = x.astype(jnp.bfloat16).astype(jnp.float32)
    logits = (jnp.dot(xb, params["w_out"].astype(jnp.float32),
                      precision=jax.lax.Precision.HIGHEST) + params["b_out"])
    logp = jax.nn.log_softmax(logits, axis=1)
    return logp[:, :out_size], (jnp.stack(hs), jnp.stack(cs))


if __name__ == "__main__":
    # Small shapes consistent with the module (original uses hidden_size=1000,
    # which would be padded to 1024 by init_params).
    hidden_size = 128
    output_size = 256
    num_layers = 4

    key = jax.random.PRNGKey(0)
    params, Hp, Vp = init_params(key, hidden_size, output_size, num_layers)

    # initHidden(): zeros (state circulates at padded width Hp).
    h0 = jnp.zeros((num_layers, 1, Hp), jnp.float32)
    c0 = jnp.zeros((num_layers, 1, Hp), jnp.float32)
    token = jnp.int32(3)

    logp, (h_n, c_n) = decoder_rnn_forward(token, params, (h0, c0),
                                           out_size=output_size)
    jax.block_until_ready((logp, h_n, c_n))

    assert logp.shape == (1, output_size)
    assert h_n.shape == (num_layers, 1, Hp)
    assert c_n.shape == (num_layers, 1, Hp)
    # log_softmax sanity: probs sum to 1.
    assert abs(float(jnp.sum(jnp.exp(logp))) - 1.0) < 1e-3

    # Numerical check against a pure-JAX reference with the same bf16 weights.
    ref_logp, (ref_h, ref_c) = _reference_forward(token, params, (h0, c0),
                                                  output_size, Hp)
    assert float(jnp.max(jnp.abs(logp - ref_logp))) < 5e-3
    assert float(jnp.max(jnp.abs(h_n - ref_h))) < 5e-3
    assert float(jnp.max(jnp.abs(c_n - ref_c))) < 5e-3

    print("KERNEL_OK")
</pallas_src>

<mosaic_0001>
module attributes {stable_mosaic.version = 11 : i64} {
  func.func @_decoder_step_kernel(%arg0: i32, %arg1: memref<1xi32, #tpu.memory_space<smem>>, %arg2: memref<1x1x128xbf16, #tpu.memory_space<vmem>>, %arg3: memref<1x256x512xbf16, #tpu.memory_space<vmem>>, %arg4: memref<1x1x512xf32, #tpu.memory_space<vmem>>, %arg5: memref<1x1x128xf32, #tpu.memory_space<vmem>>, %arg6: memref<1x1x128xf32, #tpu.memory_space<vmem>>, %arg7: memref<128x256xbf16, #tpu.memory_space<vmem>>, %arg8: memref<1x256xf32, #tpu.memory_space<vmem>>, %arg9: memref<1x256xf32, #tpu.memory_space<vmem>>, %arg10: memref<1x1x128xf32, #tpu.memory_space<vmem>>, %arg11: memref<1x1x128xf32, #tpu.memory_space<vmem>>, %arg12: memref<1x256xf32, #tpu.memory_space<vmem>>, %arg13: memref<1x256xf32, #tpu.memory_space<vmem>>) attributes {dimension_semantics = [#tpu.dimension_semantics<arbitrary>], iteration_bounds = array<i64: 5>, scalar_prefetch = 1 : i64, scratch_operands = 2 : i64, tpu.core_type = #tpu.core_type<tc>, window_params = [{transform_indices = @transform_0, window_bounds = array<i64: 1, 1, 128>}, {transform_indices = @transform_1, window_bounds = array<i64: 1, 256, 512>}, {transform_indices = @transform_2, window_bounds = array<i64: 1, 1, 512>}, {transform_indices = @transform_3, window_bounds = array<i64: 1, 1, 128>}, {transform_indices = @transform_4, window_bounds = array<i64: 1, 1, 128>}, {transform_indices = @transform_5, window_bounds = array<i64: 128, 256>}, {transform_indices = @transform_6, window_bounds = array<i64: 1, 256>}, {pipeline_mode = #tpu.pipeline_mode<synchronous>, transform_indices = @transform_7, window_bounds = array<i64: 1, 256>}, {transform_indices = @transform_8, window_bounds = array<i64: 1, 1, 128>}, {transform_indices = @transform_9, window_bounds = array<i64: 1, 1, 128>}]} {
    %c0_i32 = arith.constant 0 : i32
    %0 = arith.cmpi eq, %arg0, %c0_i32 : i32
    %1 = arith.extui %0 : i1 to i32
    %c0_i32_0 = arith.constant 0 : i32
    %2 = arith.cmpi ne, %1, %c0_i32_0 : i32
    scf.if %2 {
      %c0 = arith.constant 0 : index
      %c0_6 = arith.constant 0 : index
      %c0_7 = arith.constant 0 : index
      %12 = vector.load %arg2[%c0, %c0_6, %c0_7] : memref<1x1x128xbf16, #tpu.memory_space<vmem>>, vector<1x1x128xbf16>
      %13 = vector.shape_cast %12 : vector<1x1x128xbf16> to vector<1x128xbf16>
      %14 = arith.extf %13 : vector<1x128xbf16> to vector<1x128xf32>
      %cst = arith.constant 0.000000e+00 : f32
      %15 = vector.broadcast %cst : f32 to vector<1x128xf32>
      %16 = arith.maximumf %14, %15 : vector<1x128xf32>
      %c0_8 = arith.constant 0 : index
      %c0_9 = arith.constant 0 : index
      %17 = vector.load %arg12[%c0_8, %c0_9] : memref<1x256xf32, #tpu.memory_space<vmem>>, vector<1x128xf32>
      tpu.vector_store %arg12[%c0_8, %c0_9], %16 {strides = array<i32>} : memref<1x256xf32, #tpu.memory_space<vmem>>, vector<1x128xf32>,
    } else {
    }
    %c4_i32 = arith.constant 4 : i32
    %3 = arith.cmpi slt, %arg0, %c4_i32 : i32
    %4 = arith.extui %3 : i1 to i32
    %c0_i32_1 = arith.constant 0 : i32
    %5 = arith.cmpi ne, %4, %c0_i32_1 : i32
    scf.if %5 {
      %c0 = arith.constant 0 : index
      %c0_6 = arith.constant 0 : index
      %c0_7 = arith.constant 0 : index
      %12 = vector.load %arg6[%c0, %c0_6, %c0_7] : memref<1x1x128xf32, #tpu.memory_space<vmem>>, vector<1x1x128xf32>
      %13 = vector.shape_cast %12 : vector<1x1x128xf32> to vector<1x128xf32>
      %c0_8 = arith.constant 0 : index
      %c0_9 = arith.constant 0 : index
      %c0_10 = arith.constant 0 : index
      %14 = vector.load %arg5[%c0_8, %c0_9, %c0_10] : memref<1x1x128xf32, #tpu.memory_space<vmem>>, vector<1x1x128xf32>
      %15 = vector.shape_cast %14 : vector<1x1x128xf32> to vector<1x128xf32>
      %c0_11 = arith.constant 0 : index
      %c128 = arith.constant 128 : index
      %16 = vector.load %arg12[%c0_11, %c128] : memref<1x256xf32, #tpu.memory_space<vmem>>, vector<1x128xf32>
      tpu.vector_store %arg12[%c0_11, %c128], %15 {strides = array<i32>} : memref<1x256xf32, #tpu.memory_space<vmem>>, vector<1x128xf32>,
      %c0_12 = arith.constant 0 : index
      %c0_13 = arith.constant 0 : index
      %17 = vector.load %arg12[%c0_12, %c0_13] : memref<1x256xf32, #tpu.memory_space<vmem>>, vector<1x256xf32>
      %18 = arith.truncf %17 : vector<1x256xf32> to vector<1x256xbf16>
      %c0_14 = arith.constant 0 : index
      %c0_15 = arith.constant 0 : index
      %c0_16 = arith.constant 0 : index
      %19 = vector.load %arg3[%c0_14, %c0_15, %c0_16] : memref<1x256x512xbf16, #tpu.memory_space<vmem>>, vector<1x256x512xbf16>
      %20 = vector.shape_cast %19 : vector<1x256x512xbf16> to vector<256x512xbf16>
      %cst = arith.constant dense<0.000000e+00> : vector<1x512xf32>
      %21 = tpu.matmul %18, %20, %cst {dimension_numbers = #tpu.dot_dimension_numbers<[1], [0], [0], [1], [0, 0, 1, 1], [], []>} : vector<1x256xbf16>, vector<256x512xbf16>, vector<1x512xf32> -> vector<1x512xf32>
      %c0_17 = arith.constant 0 : index
      %c0_18 = arith.constant 0 : index
      %c0_19 = arith.constant 0 : index
      %22 = vector.load %arg4[%c0_17, %c0_18, %c0_19] : memref<1x1x512xf32, #tpu.memory_space<vmem>>, vector<1x1x512xf32>
      %23 = vector.shape_cast %22 : vector<1x1x512xf32> to vector<1x512xf32>
      %24 = arith.addf %21, %23 : vector<1x512xf32>
      %25 = vector.extract_strided_slice %24 {offsets = [0, 0], sizes = [1, 128], strides = [1, 1]} : vector<1x512xf32> to vector<1x128xf32>
      %26 = arith.negf %25 : vector<1x128xf32>
      %27 = math.exp %26 : vector<1x128xf32>
      %cst_20 = arith.constant 1.000000e+00 : f32
      %28 = vector.broadcast %cst_20 : f32 to vector<1x128xf32>
      %29 = arith.addf %28, %27 : vector<1x128xf32>
      %30 = arith.divf %28, %29 : vector<1x128xf32>
      %31 = vector.extract_strided_slice %24 {offsets = [0, 128], sizes = [1, 128], strides = [1, 1]} : vector<1x512xf32> to vector<1x128xf32>
      %32 = arith.negf %31 : vector<1x128xf32>
      %33 = math.exp %32 : vector<1x128xf32>
      %cst_21 = arith.constant 1.000000e+00 : f32
      %34 = vector.broadcast %cst_21 : f32 to vector<1x128xf32>
      %35 = arith.addf %34, %33 : vector<1x128xf32>
      %36 = arith.divf %34, %35 : vector<1x128xf32>
      %37 = vector.extract_strided_slice %24 {offsets = [0, 256], sizes = [1, 128], strides = [1, 1]} : vector<1x512xf32> to vector<1x128xf32>
      %38 = math.tanh %37 : vector<1x128xf32>
      %39 = vector.extract_strided_slice %24 {offsets = [0, 384], sizes = [1, 128], strides = [1, 1]} : vector<1x512xf32> to vector<1x128xf32>
      %40 = arith.negf %39 : vector<1x128xf32>
      %41 = math.exp %40 : vector<1x128xf32>
      %cst_22 = arith.constant 1.000000e+00 : f32
      %42 = vector.broadcast %cst_22 : f32 to vector<1x128xf32>
      %43 = arith.addf %42, %41 : vector<1x128xf32>
      %44 = arith.divf %42, %43 : vector<1x128xf32>
      %45 = arith.mulf %36, %13 : vector<1x128xf32>
      %46 = arith.mulf %30, %38 : vector<1x128xf32>
      %47 = arith.addf %45, %46 : vector<1x128xf32>
      %48 = math.tanh %47 : vector<1x128xf32>
      %49 = arith.mulf %44, %48 : vector<1x128xf32>
      %c0_23 = arith.constant 0 : index
      %c0_24 = arith.constant 0 : index
      %c0_25 = arith.constant 0 : index
      %50 = vector.load %arg10[%c0_23, %c0_24, %c0_25] : memref<1x1x128xf32, #tpu.memory_space<vmem>>, vector<1x1x128xf32>
      %51 = vector.shape_cast %50 : vector<1x1x128xf32> to vector<1x128xf32>
      %52 = vector.shape_cast %49 : vector<1x128xf32> to vector<1x1x128xf32>
      tpu.vector_store %arg10[%c0_23, %c0_24, %c0_25], %52 {strides = array<i32>} : memref<1x1x128xf32, #tpu.memory_space<vmem>>, vector<1x1x128xf32>,
      %c0_26 = arith.constant 0 : index
      %c0_27 = arith.constant 0 : index
      %c0_28 = arith.constant 0 : index
      %53 = vector.load %arg11[%c0_26, %c0_27, %c0_28] : memref<1x1x128xf32, #tpu.memory_space<vmem>>, vector<1x1x128xf32>
      %54 = vector.shape_cast %53 : vector<1x1x128xf32> to vector<1x128xf32>
      %55 = vector.shape_cast %47 : vector<1x128xf32> to vector<1x1x128xf32>
      tpu.vector_store %arg11[%c0_26, %c0_27, %c0_28], %55 {strides = array<i32>} : memref<1x1x128xf32, #tpu.memory_space<vmem>>, vector<1x1x128xf32>,
      %c0_29 = arith.constant 0 : index
      %c0_30 = arith.constant 0 : index
      %56 = vector.load %arg12[%c0_29, %c0_30] : memref<1x256xf32, #tpu.memory_space<vmem>>, vector<1x128xf32>
      tpu.vector_store %arg12[%c0_29, %c0_30], %49 {strides = array<i32>} : memref<1x256xf32, #tpu.memory_space<vmem>>, vector<1x128xf32>,
    } else {
    }
    %c4_i32_2 = arith.constant 4 : i32
    %6 = arith.cmpi sge, %arg0, %c4_i32_2 : i32
    %7 = arith.extui %6 : i1 to i32
    %c0_i32_3 = arith.constant 0 : i32
    %8 = arith.cmpi ne, %7, %c0_i32_3 : i32
    scf.if %8 {
      %c4_i32_6 = arith.constant 4 : i32
      %12 = arith.subi %arg0, %c4_i32_6 : i32
      %c0 = arith.constant 0 : index
      %c0_7 = arith.constant 0 : index
      %13 = vector.load %arg12[%c0, %c0_7] : memref<1x256xf32, #tpu.memory_space<vmem>>, vector<1x128xf32>
      %14 = arith.truncf %13 : vector<1x128xf32> to vector<1x128xbf16>
      %c0_8 = arith.constant 0 : index
      %c0_9 = arith.constant 0 : index
      %15 = vector.load %arg7[%c0_8, %c0_9] : memref<128x256xbf16, #tpu.memory_space<vmem>>, vector<128x256xbf16>
      %cst = arith.constant dense<0.000000e+00> : vector<1x256xf32>
      %16 = tpu.matmul %14, %15, %cst {dimension_numbers = #tpu.dot_dimension_numbers<[1], [0], [0], [1], [0, 0, 1, 1], [], []>} : vector<1x128xbf16>, vector<128x256xbf16>, vector<1x256xf32> -> vector<1x256xf32>
      %c0_10 = arith.constant 0 : index
      %c0_11 = arith.constant 0 : index
      %17 = vector.load %arg8[%c0_10, %c0_11] : memref<1x256xf32, #tpu.memory_space<vmem>>, vector<1x256xf32>
      %18 = arith.addf %16, %17 : vector<1x256xf32>
      %c256_i32 = arith.constant 256 : i32
      %19 = arith.muli %12, %c256_i32 : i32
      %20 = tpu.assume_multiple %19, 256 : i32
      %c0_12 = arith.constant 0 : index
      %21 = arith.index_cast %20 : i32 to index
      %22 = vector.load %arg13[%c0_12, %21] : memref<1x256xf32, #tpu.memory_space<vmem>>, vector<1x256xf32>
      tpu.vector_store %arg13[%c0_12, %21], %18 {strides = array<i32>} : memref<1x256xf32, #tpu.memory_space<vmem>>, vector<1x256xf32>,
    } else {
    }
    %c4_i32_4 = arith.constant 4 : i32
    %9 = arith.cmpi eq, %arg0, %c4_i32_4 : i32
    %10 = arith.extui %9 : i1 to i32
    %c0_i32_5 = arith.constant 0 : i32
    %11 = arith.cmpi ne, %10, %c0_i32_5 : i32
    scf.if %11 {
      %c0 = arith.constant 0 : index
      %c0_6 = arith.constant 0 : index
      %12 = vector.load %arg13[%c0, %c0_6] : memref<1x256xf32, #tpu.memory_space<vmem>>, vector<1x256xf32>
      %cst = arith.constant dense<0xFF800000> : vector<1xf32>
      %13 = vector.multi_reduction <maximumf>, %12, %cst [1] : vector<1x256xf32> to vector<1xf32>
      %14 = vector.shape_cast %13 : vector<1xf32> to vector<1x1xf32>
      %15 = vector.broadcast %14 : vector<1x1xf32> to vector<1x256xf32>
      %16 = arith.subf %12, %15 : vector<1x256xf32>
      %17 = math.exp %16 : vector<1x256xf32>
      %cst_7 = arith.constant dense<0.000000e+00> : vector<1xf32>
      %18 = vector.multi_reduction <add>, %17, %cst_7 [1] : vector<1x256xf32> to vector<1xf32>
      %19 = vector.shape_cast %18 : vector<1xf32> to vector<1x1xf32>
      %20 = math.log %19 : vector<1x1xf32>
      %21 = vector.broadcast %20 : vector<1x1xf32> to vector<1x256xf32>
      %22 = arith.subf %16, %21 : vector<1x256xf32>
      %c0_8 = arith.constant 0 : index
      %c0_9 = arith.constant 0 : index
      %23 = vector.load %arg9[%c0_8, %c0_9] : memref<1x256xf32, #tpu.memory_space<vmem>>, vector<1x256xf32>
      tpu.vector_store %arg9[%c0_8, %c0_9], %22 {strides = array<i32>} : memref<1x256xf32, #tpu.memory_space<vmem>>, vector<1x256xf32>,
    } else {
    }
    return
  }
  func.func @transform_0(%arg0: i32, %arg1: memref<1xi32, #tpu.memory_space<smem>>) -> (i32, i32, i32) {
    %c0 = arith.constant 0 : index
    %0 = memref.load %arg1[%c0] : memref<1xi32, #tpu.memory_space<smem>>
    %c0_i32 = arith.constant 0 : i32
    %c0_i32_0 = arith.constant 0 : i32
    %c0_i32_1 = arith.constant 0 : i32
    return %0, %c0_i32, %c0_i32_0 : i32, i32, i32
  }
  func.func @transform_1(%arg0: i32, %arg1: memref<1xi32, #tpu.memory_space<smem>>) -> (i32, i32, i32) {
    %c3_i32 = arith.constant 3 : i32
    %0 = arith.minsi %arg0, %c3_i32 : i32
    %c0_i32 = arith.constant 0 : i32
    %c0_i32_0 = arith.constant 0 : i32
    %c0_i32_1 = arith.constant 0 : i32
    return %0, %c0_i32, %c0_i32_0 : i32, i32, i32
  }
  func.func @transform_2(%arg0: i32, %arg1: memref<1xi32, #tpu.memory_space<smem>>) -> (i32, i32, i32) {
    %c3_i32 = arith.constant 3 : i32
    %0 = arith.minsi %arg0, %c3_i32 : i32
    %c0_i32 = arith.constant 0 : i32
    %c0_i32_0 = arith.constant 0 : i32
    %c0_i32_1 = arith.constant 0 : i32
    return %0, %c0_i32, %c0_i32_0 : i32, i32, i32
  }
  func.func @transform_3(%arg0: i32, %arg1: memref<1xi32, #tpu.memory_space<smem>>) -> (i32, i32, i32) {
    %c3_i32 = arith.constant 3 : i32
    %0 = arith.minsi %arg0, %c3_i32 : i32
    %c0_i32 = arith.constant 0 : i32
    %c0_i32_0 = arith.constant 0 : i32
    %c0_i32_1 = arith.constant 0 : i32
    return %0, %c0_i32, %c0_i32_0 : i32, i32, i32
  }
  func.func @transform_4(%arg0: i32, %arg1: memref<1xi32, #tpu.memory_space<smem>>) -> (i32, i32, i32) {
    %c3_i32 = arith.constant 3 : i32
    %0 = arith.minsi %arg0, %c3_i32 : i32
    %c0_i32 = arith.constant 0 : i32
    %c0_i32_0 = arith.constant 0 : i32
    %c0_i32_1 = arith.constant 0 : i32
    return %0, %c0_i32, %c0_i32_0 : i32, i32, i32
  }
  func.func @transform_5(%arg0: i32, %arg1: memref<1xi32, #tpu.memory_space<smem>>) -> (i32, i32) {
    %c4_i32 = arith.constant 4 : i32
    %0 = arith.subi %arg0, %c4_i32 : i32
    %c0_i32 = arith.constant 0 : i32
    %1 = arith.maxsi %0, %c0_i32 : i32
    %c0_i32_0 = arith.constant 0 : i32
    %c0_i32_1 = arith.constant 0 : i32
    return %c0_i32_0, %1 : i32, i32
  }
  func.func @transform_6(%arg0: i32, %arg1: memref<1xi32, #tpu.memory_space<smem>>) -> (i32, i32) {
    %c4_i32 = arith.constant 4 : i32
    %0 = arith.subi %arg0, %c4_i32 : i32
    %c0_i32 = arith.constant 0 : i32
    %1 = arith.maxsi %0, %c0_i32 : i32
    %c0_i32_0 = arith.constant 0 : i32
    %c0_i32_1 = arith.constant 0 : i32
    return %c0_i32_0, %1 : i32, i32
  }
  func.func @transform_7(%arg0: i32, %arg1: memref<1xi32, #tpu.memory_space<smem>>) -> (i32, i32) {
    %c0_i32 = arith.constant 0 : i32
    %c0_i32_0 = arith.constant 0 : i32
    %c0_i32_1 = arith.constant 0 : i32
    return %c0_i32, %c0_i32_0 : i32, i32
  }
  func.func @transform_8(%arg0: i32, %arg1: memref<1xi32, #tpu.memory_space<smem>>) -> (i32, i32, i32) {
    %c3_i32 = arith.constant 3 : i32
    %0 = arith.minsi %arg0, %c3_i32 : i32
    %c0_i32 = arith.constant 0 : i32
    %c0_i32_0 = arith.constant 0 : i32
    %c0_i32_1 = arith.constant 0 : i32
    return %0, %c0_i32, %c0_i32_0 : i32, i32, i32
  }
  func.func @transform_9(%arg0: i32, %arg1: memref<1xi32, #tpu.memory_space<smem>>) -> (i32, i32, i32) {
    %c3_i32 = arith.constant 3 : i32
    %0 = arith.minsi %arg0, %c3_i32 : i32
    %c0_i32 = arith.constant 0 : i32
    %c0_i32_0 = arith.constant 0 : i32
    %c0_i32_1 = arith.constant 0 : i32
    return %0, %c0_i32, %c0_i32_0 : i32, i32, i32
  }
}

</mosaic_0001>

<llo_original>
// kernel: decoder_rnn_forward.1
$region0: #{decoder_rnn_forward.1}
  #allocation0 [shape = 'u32[]', space=smem, size = 0x4, offset = 0x4, fixed_abs, tag = 'smem constant byte address 0x4 - core index']
  #allocation1 [shape = 'u32[72,128]{1,0:T(1,128)}', space=vmem, size = 0x9000, scoped, tag = 'internal scratch']
  #allocation2 [shape = 'f32[1,256]{1,0:T(1,128)}', space=vmem, size = 0x400, scoped, tag = 'scratch operand']
  #allocation3 [shape = 'f32[1,256]{1,0:T(1,128)}', space=vmem, size = 0x400, scoped, tag = 'scratch operand']
  #allocation4 [shape = 's32[1]{0}', space=sflag, size = 0x4, scoped, tag = 'scoped memory for decoder_rnn_forward.1']
  #allocation5 [shape = 's32[1]{0:T(128)S(6)}', space=smem, size = 0x200, scoped, tag = 'prefetched SMEM operand 0']
  %s0 = inlined_call_operand.<no memory space> [shape: s32[1], index: 0, kind: input, shape index: {}]
  %s1 = inlined_call_operand.vmem [shape: bf16[256,1,128], index: 1, kind: input, shape index: {}]
  %s2 = inlined_call_operand.hbm [shape: bf16[4,256,512], index: 2, kind: input, shape index: {}]
  %s3 = inlined_call_operand.vmem [shape: f32[4,1,512], index: 3, kind: input, shape index: {}]
  %s4 = inlined_call_operand.vmem [shape: f32[4,1,128], index: 4, kind: input, shape index: {}]
  %s5 = inlined_call_operand.vmem [shape: f32[4,1,128], index: 5, kind: input, shape index: {}]
  %s6 = inlined_call_operand.vmem [shape: bf16[128,256], index: 6, kind: input, shape index: {}]
  %s7 = inlined_call_operand.vmem [shape: f32[1,256], index: 7, kind: input, shape index: {}]
  %s8 = inlined_call_operand.hbm [shape: f32[1,256], index: 8, kind: output, shape index: {0}]
  %s9 = inlined_call_operand.hbm [shape: f32[4,1,128], index: 9, kind: output, shape index: {1}]
  %s10 = inlined_call_operand.hbm [shape: f32[4,1,128], index: 10, kind: output, shape index: {2}]
  %11 = xla_tuple %s8, %s9, %s10
  %s12 = sld [smem:[#allocation0]]
  $region97: #{decoder_rnn_forward.1} parent=0
    _
  %s14 = ssub.s32 1, %s12
  %s15 = scalar_select 0, %s14, %s12
  %16 = sst [smem:[#allocation5]] %s0
  $region1: #{decoder_rnn_forward.1} parent=0
    #allocation6 [shape = 'u8[524288]{0}', space=vmem, size = 0x80000, scoped, tag = 'input window, operand 2']
    #allocation7 [shape = 's32[2]{0}', space=sflag, size = 0x8, scoped, tag = 'scoped memory for decoder_rnn_forward.1']
    #allocation8 [shape = 's32[2]{0}', space=sflag, size = 0x8, scoped, tag = 'scoped memory for decoder_rnn_forward.1']
    #allocation9 [shape = 'u8[1024]{0}', space=vmem, size = 0x400, scoped, tag = 'output window, operand 0, single buffered']
    #allocation10 [shape = 'u8[1024]{0}', space=vmem, size = 0x400, scoped, tag = 'output window, operand 1']
    #allocation11 [shape = 's32[2]{0}', space=sflag, size = 0x8, scoped, tag = 'scoped memory for decoder_rnn_forward.1']
    #allocation12 [shape = 'u8[1024]{0}', space=vmem, size = 0x400, scoped, tag = 'output window, operand 2']
    %17 = vsyncpa [#allocation7], 0
    %s18 = scalar_lea.sflag [#allocation7], 1
    %19 = vsyncpa %s18, 0
    %20 = vsyncpa [#allocation8], 0
    %21 = vsyncpa [#allocation11], 0
    %s22 = scalar_lea.sflag [#allocation11], 1
    %23 = vsyncpa %s22, 0
    loop: start=0, step=1, limit=7
    $region2: #{decoder_rnn_forward.1} parent=1 // loop_pre_header
      _
    $region3: #{decoder_rnn_forward.1} parent=1 // loop_header
      %s25 = sphi 0, %s29
      %p26 = scmp.ge.s32.totalorder %s25, 7
      %s37 = sphi 0, %s39
      %s40 = sphi 0, %s37
      %s41 = sphi 0, %s40
      %s57 = sphi 0, %s41
      %s67 = sphi 0, %s69
      %s70 = sphi 0, %s67
      %s71 = sphi 0, %s70
      %s87 = sphi 0, %s71
      %s97 = sphi 0, %s99
      %s100 = sphi 0, %s97
      %s101 = sphi 0, %s100
      %s117 = sphi 0, %s101
      %s127 = sphi 0, %s129
      %s130 = sphi 0, %s127
      %s131 = sphi 0, %s130
      %s147 = sphi 0, %s131
      %s157 = sphi 0, %s159
      %s160 = sphi 0, %s157
      %s161 = sphi 0, %s160
      %s177 = sphi 0, %s161
      %s189 = sphi 0, %s191
      %s192 = sphi 0, %s189
      %s193 = sphi 0, %s192
      %s209 = sphi 0, %s193
      %s221 = sphi 0, %s223
      %s224 = sphi 0, %s221
      %s225 = sphi 0, %s224
      %s241 = sphi 0, %s225
      %s245 = sphi 0, %s245
      %s247 = sphi 0, %s245
      %s248 = sphi 0, %s247
      %s262 = sphi 0, %s248
      %s272 = sphi 0, %s274
      %s275 = sphi 0, %s272
      %s276 = sphi 0, %s275
      %s292 = sphi 0, %s276
      %s302 = sphi 0, %s304
      %s305 = sphi 0, %s302
      %s306 = sphi 0, %s305
      %s322 = sphi 0, %s306
    $region4: #{decoder_rnn_forward.1} parent=1 // loop_header_branch
      %28 = sbr.rel (%p26) target = $region8
    $region5: #{decoder_rnn_forward.1} parent=1 // loop_body
      %s30 = ssub.s32 %s25, 1
      %s31 = ssub.s32 %s25, 2
      %s32 = sadd.s32 %s25, 1
      %s33 = sld [smem:[#allocation5]]
      %s34 = sld [smem:[#allocation5]]
      %s35 = ssub.s32 %s33, %s34
      %p36 = scmp.eq.s32.totalorder %s35, 0
      %s38 = sadd.s32 %s37, 1
      %s39 = scalar_select %p36, %s37, %s38
      %p42 = pneg %p36
      %p43 = scmp.eq.s32.totalorder %s25, 4
      %p44 = por %p42, %p43
      %p45 = scmp.ne.s32.totalorder %s37, %s40
      %p46 = scmp.eq.s32.totalorder %s25, 0
      %p47 = por %p45, %p46
      %p48 = scmp.ne.s32.totalorder %s37, %s40
      %p49 = scmp.eq.s32.totalorder %s30, 4
      %p50 = por %p48, %p49
      %p51 = scmp.ne.s32.totalorder %s40, %s41
      %p52 = scmp.eq.s32.totalorder %s30, 0
      %p53 = por %p51, %p52
      %p54 = scmp.ne.s32.totalorder %s40, %s41
      %p55 = scmp.eq.s32.totalorder %s31, 4
      %p56 = por %p54, %p55
      %p58 = scmp.ne.s32.totalorder %s41, %s57
      %p59 = scmp.eq.s32.totalorder %s31, 0
      %p60 = por %p58, %p59
      %p61 = scmp.lt.s32.totalorder %s25, 3
      %s62 = scalar_select %p61, %s25, 3
      %p63 = scmp.lt.s32.totalorder %s32, 3
      %s64 = scalar_select %p63, %s32, 3
      %s65 = ssub.s32 %s62, %s64
      %p66 = scmp.eq.s32.totalorder %s65, 0
      %s68 = sadd.s32 %s67, 1
      %s69 = scalar_select %p66, %s67, %s68
      %p72 = pneg %p66
      %p73 = scmp.eq.s32.totalorder %s25, 4
      %p74 = por %p72, %p73
      %p75 = scmp.ne.s32.totalorder %s67, %s70
      %p76 = scmp.eq.s32.totalorder %s25, 0
      %p77 = por %p75, %p76
      %p78 = scmp.ne.s32.totalorder %s67, %s70
      %p79 = scmp.eq.s32.totalorder %s30, 4
      %p80 = por %p78, %p79
      %p81 = scmp.ne.s32.totalorder %s70, %s71
      %p82 = scmp.eq.s32.totalorder %s30, 0
      %p83 = por %p81, %p82
      %p84 = scmp.ne.s32.totalorder %s70, %s71
      %p85 = scmp.eq.s32.totalorder %s31, 4
      %p86 = por %p84, %p85
      %p88 = scmp.ne.s32.totalorder %s71, %s87
      %p89 = scmp.eq.s32.totalorder %s31, 0
      %p90 = por %p88, %p89
      %p91 = scmp.lt.s32.totalorder %s25, 3
      %s92 = scalar_select %p91, %s25, 3
      %p93 = scmp.lt.s32.totalorder %s32, 3
      %s94 = scalar_select %p93, %s32, 3
      %s95 = ssub.s32 %s92, %s94
      %p96 = scmp.eq.s32.totalorder %s95, 0
      %s98 = sadd.s32 %s97, 1
      %s99 = scalar_select %p96, %s97, %s98
      %p102 = pneg %p96
      %p103 = scmp.eq.s32.totalorder %s25, 4
      %p104 = por %p102, %p103
      %p105 = scmp.ne.s32.totalorder %s97, %s100
      %p106 = scmp.eq.s32.totalorder %s25, 0
      %p107 = por %p105, %p106
      %p108 = scmp.ne.s32.totalorder %s97, %s100
      %p109 = scmp.eq.s32.totalorder %s30, 4
      %p110 = por %p108, %p109
      %p111 = scmp.ne.s32.totalorder %s100, %s101
      %p112 = scmp.eq.s32.totalorder %s30, 0
      %p113 = por %p111, %p112
      %p114 = scmp.ne.s32.totalorder %s100, %s101
      %p115 = scmp.eq.s32.totalorder %s31, 4
      %p116 = por %p114, %p115
      %p118 = scmp.ne.s32.totalorder %s101, %s117
      %p119 = scmp.eq.s32.totalorder %s31, 0
      %p120 = por %p118, %p119
      %p121 = scmp.lt.s32.totalorder %s25, 3
      %s122 = scalar_select %p121, %s25, 3
      %p123 = scmp.lt.s32.totalorder %s32, 3
      %s124 = scalar_select %p123, %s32, 3
      %s125 = ssub.s32 %s122, %s124
      %p126 = scmp.eq.s32.totalorder %s125, 0
      %s128 = sadd.s32 %s127, 1
      %s129 = scalar_select %p126, %s127, %s128
      %p132 = pneg %p126
      %p133 = scmp.eq.s32.totalorder %s25, 4
      %p134 = por %p132, %p133
      %p135 = scmp.ne.s32.totalorder %s127, %s130
      %p136 = scmp.eq.s32.totalorder %s25, 0
      %p137 = por %p135, %p136
      %p138 = scmp.ne.s32.totalorder %s127, %s130
      %p139 = scmp.eq.s32.totalorder %s30, 4
      %p140 = por %p138, %p139
      %p141 = scmp.ne.s32.totalorder %s130, %s131
      %p142 = scmp.eq.s32.totalorder %s30, 0
      %p143 = por %p141, %p142
      %p144 = scmp.ne.s32.totalorder %s130, %s131
      %p145 = scmp.eq.s32.totalorder %s31, 4
      %p146 = por %p144, %p145
      %p148 = scmp.ne.s32.totalorder %s131, %s147
      %p149 = scmp.eq.s32.totalorder %s31, 0
      %p150 = por %p148, %p149
      %p151 = scmp.lt.s32.totalorder %s25, 3
      %s152 = scalar_select %p151, %s25, 3
      %p153 = scmp.lt.s32.totalorder %s32, 3
      %s154 = scalar_select %p153, %s32, 3
      %s155 = ssub.s32 %s152, %s154
      %p156 = scmp.eq.s32.totalorder %s155, 0
      %s158 = sadd.s32 %s157, 1
      %s159 = scalar_select %p156, %s157, %s158
      %p162 = pneg %p156
      %p163 = scmp.eq.s32.totalorder %s25, 4
      %p164 = por %p162, %p163
      %p165 = scmp.ne.s32.totalorder %s157, %s160
      %p166 = scmp.eq.s32.totalorder %s25, 0
      %p167 = por %p165, %p166
      %p168 = scmp.ne.s32.totalorder %s157, %s160
      %p169 = scmp.eq.s32.totalorder %s30, 4
      %p170 = por %p168, %p169
      %p171 = scmp.ne.s32.totalorder %s160, %s161
      %p172 = scmp.eq.s32.totalorder %s30, 0
      %p173 = por %p171, %p172
      %p174 = scmp.ne.s32.totalorder %s160, %s161
      %p175 = scmp.eq.s32.totalorder %s31, 4
      %p176 = por %p174, %p175
      %p178 = scmp.ne.s32.totalorder %s161, %s177
      %p179 = scmp.eq.s32.totalorder %s31, 0
      %p180 = por %p178, %p179
      %s181 = ssub.s32 %s25, 4
      %p182 = scmp.gt.s32.totalorder %s181, 0
      %s183 = scalar_select %p182, %s181, 0
      %s184 = ssub.s32 %s32, 4
      %p185 = scmp.gt.s32.totalorder %s184, 0
      %s186 = scalar_select %p185, %s184, 0
      %s187 = ssub.s32 %s183, %s186
      %p188 = scmp.eq.s32.totalorder %s187, 0
      %s190 = sadd.s32 %s189, 1
      %s191 = scalar_select %p188, %s189, %s190
      %p194 = pneg %p188
      %p195 = scmp.eq.s32.totalorder %s25, 4
      %p196 = por %p194, %p195
      %p197 = scmp.ne.s32.totalorder %s189, %s192
      %p198 = scmp.eq.s32.totalorder %s25, 0
      %p199 = por %p197, %p198
      %p200 = scmp.ne.s32.totalorder %s189, %s192
      %p201 = scmp.eq.s32.totalorder %s30, 4
      %p202 = por %p200, %p201
      %p203 = scmp.ne.s32.totalorder %s192, %s193
      %p204 = scmp.eq.s32.totalorder %s30, 0
      %p205 = por %p203, %p204
      %p206 = scmp.ne.s32.totalorder %s192, %s193
      %p207 = scmp.eq.s32.totalorder %s31, 4
      %p208 = por %p206, %p207
      %p210 = scmp.ne.s32.totalorder %s193, %s209
      %p211 = scmp.eq.s32.totalorder %s31, 0
      %p212 = por %p210, %p211
      %s213 = ssub.s32 %s25, 4
      %p214 = scmp.gt.s32.totalorder %s213, 0
      %s215 = scalar_select %p214, %s213, 0
      %s216 = ssub.s32 %s32, 4
      %p217 = scmp.gt.s32.totalorder %s216, 0
      %s218 = scalar_select %p217, %s216, 0
      %s219 = ssub.s32 %s215, %s218
      %p220 = scmp.eq.s32.totalorder %s219, 0
      %s222 = sadd.s32 %s221, 1
      %s223 = scalar_select %p220, %s221, %s222
      %p226 = pneg %p220
      %p227 = scmp.eq.s32.totalorder %s25, 4
      %p228 = por %p226, %p227
      %p229 = scmp.ne.s32.totalorder %s221, %s224
      %p230 = scmp.eq.s32.totalorder %s25, 0
      %p231 = por %p229, %p230
      %p232 = scmp.ne.s32.totalorder %s221, %s224
      %p233 = scmp.eq.s32.totalorder %s30, 4
      %p234 = por %p232, %p233
      %p235 = scmp.ne.s32.totalorder %s224, %s225
      %p236 = scmp.eq.s32.totalorder %s30, 0
      %p237 = por %p235, %p236
      %p238 = scmp.ne.s32.totalorder %s224, %s225
      %p239 = scmp.eq.s32.totalorder %s31, 4
      %p240 = por %p238, %p239
      %p242 = scmp.ne.s32.totalorder %s225, %s241
      %p243 = scmp.eq.s32.totalorder %s31, 0
      %p244 = por %p242, %p243
      %s246 = sadd.s32 %s245, 1
      %p249 = scmp.eq.s32.totalorder %s25, 4
      %p250 = scmp.ne.s32.totalorder %s245, %s247
      %p251 = scmp.eq.s32.totalorder %s25, 0
      %p252 = por %p250, %p251
      %p253 = scmp.ne.s32.totalorder %s245, %s247
      %p254 = scmp.eq.s32.totalorder %s30, 4
      %p255 = por %p253, %p254
      %p256 = scmp.ne.s32.totalorder %s247, %s248
      %p257 = scmp.eq.s32.totalorder %s30, 0
      %p258 = por %p256, %p257
      %p259 = scmp.ne.s32.totalorder %s247, %s248
      %p260 = scmp.eq.s32.totalorder %s31, 4
      %p261 = por %p259, %p260
      %p263 = scmp.ne.s32.totalorder %s248, %s262
      %p264 = scmp.eq.s32.totalorder %s31, 0
      %p265 = por %p263, %p264
      %p266 = scmp.lt.s32.totalorder %s25, 3
      %s267 = scalar_select %p266, %s25, 3
      %p268 = scmp.lt.s32.totalorder %s32, 3
      %s269 = scalar_select %p268, %s32, 3
      %s270 = ssub.s32 %s267, %s269
      %p271 = scmp.eq.s32.totalorder %s270, 0
      %s273 = sadd.s32 %s272, 1
      %s274 = scalar_select %p271, %s272, %s273
      %p277 = pneg %p271
      %p278 = scmp.eq.s32.totalorder %s25, 4
      %p279 = por %p277, %p278
      %p280 = scmp.ne.s32.totalorder %s272, %s275
      %p281 = scmp.eq.s32.totalorder %s25, 0
      %p282 = por %p280, %p281
      %p283 = scmp.ne.s32.totalorder %s272, %s275
      %p284 = scmp.eq.s32.totalorder %s30, 4
      %p285 = por %p283, %p284
      %p286 = scmp.ne.s32.totalorder %s275, %s276
      %p287 = scmp.eq.s32.totalorder %s30, 0
      %p288 = por %p286, %p287
      %p289 = scmp.ne.s32.totalorder %s275, %s276
      %p290 = scmp.eq.s32.totalorder %s31, 4
      %p291 = por %p289, %p290
      %p293 = scmp.ne.s32.totalorder %s276, %s292
      %p294 = scmp.eq.s32.totalorder %s31, 0
      %p295 = por %p293, %p294
      %p296 = scmp.lt.s32.totalorder %s25, 3
      %s297 = scalar_select %p296, %s25, 3
      %p298 = scmp.lt.s32.totalorder %s32, 3
      %s299 = scalar_select %p298, %s32, 3
      %s300 = ssub.s32 %s297, %s299
      %p301 = scmp.eq.s32.totalorder %s300, 0
      %s303 = sadd.s32 %s302, 1
      %s304 = scalar_select %p301, %s302, %s303
      %p307 = pneg %p301
      %p308 = scmp.eq.s32.totalorder %s25, 4
      %p309 = por %p307, %p308
      %p310 = scmp.ne.s32.totalorder %s302, %s305
      %p311 = scmp.eq.s32.totalorder %s25, 0
      %p312 = por %p310, %p311
      %p313 = scmp.ne.s32.totalorder %s302, %s305
      %p314 = scmp.eq.s32.totalorder %s30, 4
      %p315 = por %p313, %p314
      %p316 = scmp.ne.s32.totalorder %s305, %s306
      %p317 = scmp.eq.s32.totalorder %s30, 0
      %p318 = por %p316, %p317
      %p319 = scmp.ne.s32.totalorder %s305, %s306
      %p320 = scmp.eq.s32.totalorder %s31, 4
      %p321 = por %p319, %p320
      %p323 = scmp.ne.s32.totalorder %s306, %s322
      %p324 = scmp.eq.s32.totalorder %s31, 0
      %p325 = por %p323, %p324
      %p326 = scmp.le.s32.totalorder 1, %s25
      %p327 = scmp.lt.s32.totalorder %s25, 6
      %p328 = pnand %p326, %p327
      %p329 = pneg %p328
      // Predicated region
      $region9: #{decoder_rnn_forward.1} parent=5 // pred_check
        _
      $region10: #{decoder_rnn_forward.1} parent=5 // pred_check_branch
        %331 = sbr.rel (%p328) target = $region12
      $region11: #{decoder_rnn_forward.1} parent=5 // pred_region
        %s332 = ssub.s32 %s25, 1
        // Predicated region
        $region13: #{decoder_rnn_forward.1} parent=11 // pred_check
          %p333 = pneg %p53
        $region14: #{decoder_rnn_forward.1} parent=11 // pred_check_branch
          %335 = sbr.rel (%p333) target = $region16
        $region15: #{decoder_rnn_forward.1} parent=11 // pred_region
          %s336 = sld [smem:[#allocation5]]
          %p337 = scmp.lt.s32.totalorder %s336, 255
          %s338 = scalar_select %p337, %s336, 255
          %s339 = scalar_lea.vmem %s1, %s338
          %s340 = sld [smem:[#allocation5]]
        $region16: #{decoder_rnn_forward.1} parent=11 // pred_fallthru
          _
      $region12: #{decoder_rnn_forward.1} parent=5 // pred_fallthru
        _
      %p341 = scmp.lt.s32.totalorder %s25, 5
      // Predicated region
      $region17: #{decoder_rnn_forward.1} parent=5 // pred_check
        %p342 = pneg %p341
      $region18: #{decoder_rnn_forward.1} parent=5 // pred_check_branch
        %344 = sbr.rel (%p342) target = $region20
      $region19: #{decoder_rnn_forward.1} parent=5 // pred_region
        // Predicated region
        $region21: #{decoder_rnn_forward.1} parent=19 // pred_check
          %p345 = pneg %p77
        $region22: #{decoder_rnn_forward.1} parent=19 // pred_check_branch
          %347 = sbr.rel (%p345) target = $region24
        $region23: #{decoder_rnn_forward.1} parent=19 // pred_region
          %s348 = sand.u32 %s67, 1
          %s349 = scalar_lea.sflag [#allocation7], %s348
          %s350 = sand.u32 %s67, 1
          %s351 = smul.addr %s350, 512
          %s352 = scalar_lea.vmem [#allocation6], %s351
          %p353 = scmp.lt.s32.totalorder %s25, 3
          %s354 = scalar_select %p353, %s25, 3
          %356 = vsyncadd %s349, 0
          %s357 = smul.addr %s354, 128
          %s358 = smul.addr %s357, 4
          %s359 = scalar_lea.hbm %s2, %s358
          %s360 = sshll.u32 %s359, 4
          %s361 = int_to_ptr.hbm [resolvable:$true] %s360
          %s362 = sshll.u32 %s352, 4
          %s363 = int_to_ptr.vmem [resolvable:$true] %s362
          %368 = dma.hbm_to_vmem [thread:$0]  %s361, 8192, %s363, %s349, 256, 256, 16
        $region24: #{decoder_rnn_forward.1} parent=19 // pred_fallthru
          _
        // Predicated region
        $region25: #{decoder_rnn_forward.1} parent=19 // pred_check
          %p369 = pneg %p107
        $region26: #{decoder_rnn_forward.1} parent=19 // pred_check_branch
          %371 = sbr.rel (%p369) target = $region28
        $region27: #{decoder_rnn_forward.1} parent=19 // pred_region
          %p372 = scmp.lt.s32.totalorder %s25, 3
          %s373 = scalar_select %p372, %s25, 3
          %p374 = scmp.lt.s32.totalorder %s373, 3
          %s375 = scalar_select %p374, %s373, 3
          %s376 = smul.addr %s375, 4
          %s377 = scalar_lea.vmem %s3, %s376
          %p378 = scmp.lt.s32.totalorder %s25, 3
          %s379 = scalar_select %p378, %s25, 3
        $region28: #{decoder_rnn_forward.1} parent=19 // pred_fallthru
          _
        // Predicated region
        $region29: #{decoder_rnn_forward.1} parent=19 // pred_check
          %p380 = pneg %p137
        $region30: #{decoder_rnn_forward.1} parent=19 // pred_check_branch
          %382 = sbr.rel (%p380) target = $region32
        $region31: #{decoder_rnn_forward.1} parent=19 // pred_region
          %p383 = scmp.lt.s32.totalorder %s25, 3
          %s384 = scalar_select %p383, %s25, 3
          %p385 = scmp.lt.s32.totalorder %s384, 3
          %s386 = scalar_select %p385, %s384, 3
          %s387 = scalar_lea.vmem %s4, %s386
          %p388 = scmp.lt.s32.totalorder %s25, 3
          %s389 = scalar_select %p388, %s25, 3
        $region32: #{decoder_rnn_forward.1} parent=19 // pred_fallthru
          _
        // Predicated region
        $region33: #{decoder_rnn_forward.1} parent=19 // pred_check
          %p390 = pneg %p167
        $region34: #{decoder_rnn_forward.1} parent=19 // pred_check_branch
          %392 = sbr.rel (%p390) target = $region36
        $region35: #{decoder_rnn_forward.1} parent=19 // pred_region
          %p393 = scmp.lt.s32.totalorder %s25, 3
          %s394 = scalar_select %p393, %s25, 3
          %p395 = scmp.lt.s32.totalorder %s394, 3
          %s396 = scalar_select %p395, %s394, 3
          %s397 = scalar_lea.vmem %s5, %s396
          %p398 = scmp.lt.s32.totalorder %s25, 3
          %s399 = scalar_select %p398, %s25, 3
        $region36: #{decoder_rnn_forward.1} parent=19 // pred_fallthru
          _
        // Predicated region
        $region37: #{decoder_rnn_forward.1} parent=19 // pred_check
          %p400 = pneg %p199
        $region38: #{decoder_rnn_forward.1} parent=19 // pred_check_branch
          %402 = sbr.rel (%p400) target = $region40
        $region39: #{decoder_rnn_forward.1} parent=19 // pred_region
          %s403 = ssub.s32 %s25, 4
          %p404 = scmp.gt.s32.totalorder %s403, 0
          %s405 = scalar_select %p404, %s403, 0
          %s406 = smul.u32 2, %s405
          %p407 = scmp.lt.s32.totalorder %s406, 1
          %s408 = scalar_select %p407, %s406, 1
          %s409 = smul.addr %s408, 4
          %s410 = scalar_lea.vmem %s6, %s409
          %s411 = ssub.s32 %s25, 4
          %p412 = scmp.gt.s32.totalorder %s411, 0
          %s413 = scalar_select %p412, %s411, 0
          %s414 = smul.u32 2, %s413
        $region40: #{decoder_rnn_forward.1} parent=19 // pred_fallthru
          _
        // Predicated region
        $region41: #{decoder_rnn_forward.1} parent=19 // pred_check
          %p415 = pneg %p231
        $region42: #{decoder_rnn_forward.1} parent=19 // pred_check_branch
          %417 = sbr.rel (%p415) target = $region44
        $region43: #{decoder_rnn_forward.1} parent=19 // pred_region
          %s418 = ssub.s32 %s25, 4
          %p419 = scmp.gt.s32.totalorder %s418, 0
          %s420 = scalar_select %p419, %s418, 0
          %s421 = smul.u32 2, %s420
          %p422 = scmp.lt.s32.totalorder %s421, 1
          %s423 = scalar_select %p422, %s421, 1
          %s424 = scalar_lea.vmem %s7, %s423
          %s425 = ssub.s32 %s25, 4
          %p426 = scmp.gt.s32.totalorder %s425, 0
          %s427 = scalar_select %p426, %s425, 0
          %s428 = smul.u32 2, %s427
        $region44: #{decoder_rnn_forward.1} parent=19 // pred_fallthru
          _
      $region20: #{decoder_rnn_forward.1} parent=5 // pred_fallthru
        _
      %p429 = scmp.le.s32.totalorder 1, %s25
      %p430 = scmp.lt.s32.totalorder %s25, 6
      %p431 = pnand %p429, %p430
      %p432 = pneg %p431
      // Predicated region
      $region45: #{decoder_rnn_forward.1} parent=5 // pred_check
        _
      $region46: #{decoder_rnn_forward.1} parent=5 // pred_check_branch
        %434 = sbr.rel (%p431) target = $region48
      $region47: #{decoder_rnn_forward.1} parent=5 // pred_region
        %s435 = ssub.s32 %s25, 1
        %s436 = sand.u32 %s70, 1
        %s437 = scalar_lea.sflag [#allocation7], %s436
        %s438 = sand.u32 %s70, 1
        %s439 = smul.addr %s438, 512
        %s440 = scalar_lea.vmem [#allocation6], %s439
        // Predicated region
        $region49: #{decoder_rnn_forward.1} parent=47 // pred_check
          %p441 = pneg %p83
        $region50: #{decoder_rnn_forward.1} parent=47 // pred_check_branch
          %443 = sbr.rel (%p441) target = $region52
        $region51: #{decoder_rnn_forward.1} parent=47 // pred_region
          %445 = dma.done %s437, 8192
        $region52: #{decoder_rnn_forward.1} parent=47 // pred_fallthru
          _
        %s446 = sld [smem:[#allocation5]]
        %p447 = scmp.lt.s32.totalorder %s446, 255
        %s448 = scalar_select %p447, %s446, 255
        %s449 = scalar_lea.vmem %s1, %s448
        %p450 = pneg %p53
        %p451 = pneg %p50
        %s452 = sand.u32 %s70, 1
        %s453 = scalar_lea.sflag [#allocation7], %s452
        %s454 = sand.u32 %s70, 1
        %s455 = smul.addr %s454, 512
        %s456 = scalar_lea.vmem [#allocation6], %s455
        %p457 = pneg %p83
        %p458 = pneg %p80
        %p459 = scmp.lt.s32.totalorder %s30, 3
        %s460 = scalar_select %p459, %s30, 3
        %p461 = scmp.lt.s32.totalorder %s460, 3
        %s462 = scalar_select %p461, %s460, 3
        %s463 = smul.addr %s462, 4
        %s464 = scalar_lea.vmem %s3, %s463
        %p465 = pneg %p113
        %p466 = pneg %p110
        %p467 = scmp.lt.s32.totalorder %s30, 3
        %s468 = scalar_select %p467, %s30, 3
        %p469 = scmp.lt.s32.totalorder %s468, 3
        %s470 = scalar_select %p469, %s468, 3
        %s471 = scalar_lea.vmem %s4, %s470
        %p472 = pneg %p143
        %p473 = pneg %p140
        %p474 = scmp.lt.s32.totalorder %s30, 3
        %s475 = scalar_select %p474, %s30, 3
        %p476 = scmp.lt.s32.totalorder %s475, 3
        %s477 = scalar_select %p476, %s475, 3
        %s478 = scalar_lea.vmem %s5, %s477
        %p479 = pneg %p173
        %p480 = pneg %p170
        %s481 = ssub.s32 %s30, 4
        %p482 = scmp.gt.s32.totalorder %s481, 0
        %s483 = scalar_select %p482, %s481, 0
        %s484 = smul.u32 2, %s483
        %p485 = scmp.lt.s32.totalorder %s484, 1
        %s486 = scalar_select %p485, %s484, 1
        %s487 = smul.addr %s486, 4
        %s488 = scalar_lea.vmem %s6, %s487
        %p489 = pneg %p205
        %p490 = pneg %p202
        %s491 = ssub.s32 %s30, 4
        %p492 = scmp.gt.s32.totalorder %s491, 0
        %s493 = scalar_select %p492, %s491, 0
        %s494 = smul.u32 2, %s493
        %p495 = scmp.lt.s32.totalorder %s494, 1
        %s496 = scalar_select %p495, %s494, 1
        %s497 = scalar_lea.vmem %s7, %s496
        %p498 = pneg %p237
        %p499 = pneg %p234
        %p500 = pneg %p258
        %p501 = pneg %p255
        %p502 = pneg %p288
        %p503 = pneg %p285
        %s504 = sand.u32 %s30, 1
        %s505 = scalar_lea.sflag [#allocation11], %s504
        %s506 = sand.u32 %s275, 1
        %s507 = scalar_lea.vmem [#allocation10], %s506
        %p508 = pneg %p318
        %p509 = pneg %p315
        %s510 = sand.u32 %s30, 1
        %s511 = scalar_lea.sflag [#allocation11], %s510
        %s512 = sand.u32 %s305, 1
        %s513 = scalar_lea.vmem [#allocation12], %s512
        %s514 = sld [smem:[#allocation5]]
        %p515 = scmp.lt.s32.totalorder %s514, 255
        %s516 = scalar_select %p515, %s514, 255
        %s517 = scalar_lea.vmem %s1, %s516
        %s518 = sld [smem:[#allocation5]]
        %p519 = scmp.lt.s32.totalorder %s30, 3
        %s520 = scalar_select %p519, %s30, 3
        %p521 = scmp.lt.s32.totalorder %s30, 3
        %s522 = scalar_select %p521, %s30, 3
        %p523 = scmp.lt.s32.totalorder %s522, 3
        %s524 = scalar_select %p523, %s522, 3
        %s525 = smul.addr %s524, 4
        %s526 = scalar_lea.vmem %s3, %s525
        %p527 = scmp.lt.s32.totalorder %s30, 3
        %s528 = scalar_select %p527, %s30, 3
        %p529 = scmp.lt.s32.totalorder %s30, 3
        %s530 = scalar_select %p529, %s30, 3
        %p531 = scmp.lt.s32.totalorder %s530, 3
        %s532 = scalar_select %p531, %s530, 3
        %s533 = scalar_lea.vmem %s4, %s532
        %p534 = scmp.lt.s32.totalorder %s30, 3
        %s535 = scalar_select %p534, %s30, 3
        %p536 = scmp.lt.s32.totalorder %s30, 3
        %s537 = scalar_select %p536, %s30, 3
        %p538 = scmp.lt.s32.totalorder %s537, 3
        %s539 = scalar_select %p538, %s537, 3
        %s540 = scalar_lea.vmem %s5, %s539
        %p541 = scmp.lt.s32.totalorder %s30, 3
        %s542 = scalar_select %p541, %s30, 3
        %s543 = ssub.s32 %s30, 4
        %p544 = scmp.gt.s32.totalorder %s543, 0
        %s545 = scalar_select %p544, %s543, 0
        %s546 = smul.u32 2, %s545
        %p547 = scmp.lt.s32.totalorder %s546, 1
        %s548 = scalar_select %p547, %s546, 1
        %s549 = smul.addr %s548, 4
        %s550 = scalar_lea.vmem %s6, %s549
        %s551 = ssub.s32 %s30, 4
        %p552 = scmp.gt.s32.totalorder %s551, 0
        %s553 = scalar_select %p552, %s551, 0
        %s554 = smul.u32 2, %s553
        %s555 = ssub.s32 %s30, 4
        %p556 = scmp.gt.s32.totalorder %s555, 0
        %s557 = scalar_select %p556, %s555, 0
        %s558 = smul.u32 2, %s557
        %p559 = scmp.lt.s32.totalorder %s558, 1
        %s560 = scalar_select %p559, %s558, 1
        %s561 = scalar_lea.vmem %s7, %s560
        %s562 = ssub.s32 %s30, 4
        %p563 = scmp.gt.s32.totalorder %s562, 0
        %s564 = scalar_select %p563, %s562, 0
        %s565 = smul.u32 2, %s564
        %p566 = scmp.lt.s32.totalorder %s30, 3
        %s567 = scalar_select %p566, %s30, 3
        %p568 = scmp.lt.s32.totalorder %s30, 3
        %s569 = scalar_select %p568, %s30, 3
        %p570 = scmp.eq.s32.totalorder %s30, 0
        // Predicated region
        $region53: #{decoder_rnn_forward.1} parent=47 // pred_check
          %p571 = pneg %p570
        $region54: #{decoder_rnn_forward.1} parent=47 // pred_check_branch
          %573 = sbr.rel (%p571) target = $region56
        $region55: #{decoder_rnn_forward.1} parent=47 // pred_region
          %v574 = vld [vmem:[%s517] sm:$0x1]
          %v575 = vunpack.c.l.bf16 %v574
          %v576 = vmax.f32 %v575, 0.0
          %v577 = vlaneseq
          %vm578 = vcmp.ge.s32.totalorder %v577, 0
          %vm579 = vcmp.lt.s32.totalorder %v577, 128
          %vm580 = vmand %vm578, %vm579
          %581 = vst.msk [vmem:[#allocation2] sm:$0x1] %vm580, %v576
        $region56: #{decoder_rnn_forward.1} parent=47 // pred_fallthru
          _
        %p582 = scmp.lt.s32.totalorder %s30, 4
        // Predicated region
        $region57: #{decoder_rnn_forward.1} parent=47 // pred_check
          %p583 = pneg %p582
        $region58: #{decoder_rnn_forward.1} parent=47 // pred_check_branch
          %585 = sbr.rel (%p583) target = $region60
        $region59: #{decoder_rnn_forward.1} parent=47 // pred_region
          %v586 = vld [vmem:[%s540] sm:$0x1]
          %v587 = vld [vmem:[%s533] sm:$0x1]
          %v588 = vlaneseq
          %vm589 = vcmp.ge.s32.totalorder %v588, 0
          %vm590 = vcmp.lt.s32.totalorder %v588, 128
          %vm591 = vmand %vm589, %vm590
          %592 = vst.msk [vmem:[#allocation2 + $0x1] sm:$0x1] %vm591, %v587
          %v593 = vld [vmem:[#allocation2] sm:$0x3]
          %v595 = vperm.slane %v593, 0
          %v596 = vperm.slane %v593, 1
          %v599 = vpack.c.bf16 %v595, %v595
          %v600 = vpack.c.bf16 %v596, %v596
          %v601 = vld [vmem:[%s440] sm:$0xff]
          %v602 = vld [vmem:[%s440 + $0x8] sm:$0xff]
          %v603 = vld [vmem:[%s440 + $0x10] sm:$0xff]
          %v604 = vld [vmem:[%s440 + $0x18] sm:$0xff]
          %v605 = vld [vmem:[%s440 + $0x20] sm:$0xff]
          %v606 = vld [vmem:[%s440 + $0x28] sm:$0xff]
          %v607 = vld [vmem:[%s440 + $0x30] sm:$0xff]
          %v608 = vld [vmem:[%s440 + $0x38] sm:$0xff]
          %v609 = vld [vmem:[%s440 + $0x40] sm:$0xff]
          %v610 = vld [vmem:[%s440 + $0x48] sm:$0xff]
          %v611 = vld [vmem:[%s440 + $0x50] sm:$0xff]
          %v612 = vld [vmem:[%s440 + $0x58] sm:$0xff]
          %v613 = vld [vmem:[%s440 + $0x60] sm:$0xff]
          %v614 = vld [vmem:[%s440 + $0x68] sm:$0xff]
          %v615 = vld [vmem:[%s440 + $0x70] sm:$0xff]
          %v616 = vld [vmem:[%s440 + $0x78] sm:$0xff]
          %v617 = vld [vmem:[%s440 + $0x80] sm:$0xff]
          %v618 = vld [vmem:[%s440 + $0x88] sm:$0xff]
          %v619 = vld [vmem:[%s440 + $0x90] sm:$0xff]
          %v620 = vld [vmem:[%s440 + $0x98] sm:$0xff]
          %v621 = vld [vmem:[%s440 + $0xa0] sm:$0xff]
          %v622 = vld [vmem:[%s440 + $0xa8] sm:$0xff]
          %v623 = vld [vmem:[%s440 + $0xb0] sm:$0xff]
          %v624 = vld [vmem:[%s440 + $0xb8] sm:$0xff]
          %v625 = vld [vmem:[%s440 + $0xc0] sm:$0xff]
          %v626 = vld [vmem:[%s440 + $0xc8] sm:$0xff]
          %v627 = vld [vmem:[%s440 + $0xd0] sm:$0xff]
          %v628 = vld [vmem:[%s440 + $0xd8] sm:$0xff]
          %v629 = vld [vmem:[%s440 + $0xe0] sm:$0xff]
          %v630 = vld [vmem:[%s440 + $0xe8] sm:$0xff]
          %v631 = vld [vmem:[%s440 + $0xf0] sm:$0xff]
          %v632 = vld [vmem:[%s440 + $0xf8] sm:$0xff]
          %v633 = vld [vmem:[%s440 + $0x100] sm:$0xff]
          %v634 = vld [vmem:[%s440 + $0x108] sm:$0xff]
          %v635 = vld [vmem:[%s440 + $0x110] sm:$0xff]
          %v636 = vld [vmem:[%s440 + $0x118] sm:$0xff]
          %v637 = vld [vmem:[%s440 + $0x120] sm:$0xff]
          %v638 = vld [vmem:[%s440 + $0x128] sm:$0xff]
          %v639 = vld [vmem:[%s440 + $0x130] sm:$0xff]
          %v640 = vld [vmem:[%s440 + $0x138] sm:$0xff]
          %v641 = vld [vmem:[%s440 + $0x140] sm:$0xff]
          %v642 = vld [vmem:[%s440 + $0x148] sm:$0xff]
          %v643 = vld [vmem:[%s440 + $0x150] sm:$0xff]
          %v644 = vld [vmem:[%s440 + $0x158] sm:$0xff]
          %v645 = vld [vmem:[%s440 + $0x160] sm:$0xff]
          %v646 = vld [vmem:[%s440 + $0x168] sm:$0xff]
          %v647 = vld [vmem:[%s440 + $0x170] sm:$0xff]
          %v648 = vld [vmem:[%s440 + $0x178] sm:$0xff]
          %v649 = vld [vmem:[%s440 + $0x180] sm:$0xff]
          %v650 = vld [vmem:[%s440 + $0x188] sm:$0xff]
          %v651 = vld [vmem:[%s440 + $0x190] sm:$0xff]
          %v652 = vld [vmem:[%s440 + $0x198] sm:$0xff]
          %v653 = vld [vmem:[%s440 + $0x1a0] sm:$0xff]
          %v654 = vld [vmem:[%s440 + $0x1a8] sm:$0xff]
          %v655 = vld [vmem:[%s440 + $0x1b0] sm:$0xff]
          %v656 = vld [vmem:[%s440 + $0x1b8] sm:$0xff]
          %v657 = vld [vmem:[%s440 + $0x1c0] sm:$0xff]
          %v658 = vld [vmem:[%s440 + $0x1c8] sm:$0xff]
          %v659 = vld [vmem:[%s440 + $0x1d0] sm:$0xff]
          %v660 = vld [vmem:[%s440 + $0x1d8] sm:$0xff]
          %v661 = vld [vmem:[%s440 + $0x1e0] sm:$0xff]
          %v662 = vld [vmem:[%s440 + $0x1e8] sm:$0xff]
          %v663 = vld [vmem:[%s440 + $0x1f0] sm:$0xff]
          %v664 = vld [vmem:[%s440 + $0x1f8] sm:$0xff]
          %v665 = vld [vmem:[%s526] sm:$0xf]
          %v730 = vunpack.c.l.b16 %v601
          %v731 = vunpack.c.h.b16 %v601
          %v732 = vunpack.c.l.b16 %v602
          %v733 = vunpack.c.h.b16 %v602
          %v734 = vunpack.c.l.b16 %v603
          %v735 = vunpack.c.h.b16 %v603
          %v736 = vunpack.c.l.b16 %v604
          %v737 = vunpack.c.h.b16 %v604
          %v738 = vunpack.c.l.b16 %v605
          %v739 = vunpack.c.h.b16 %v605
          %v740 = vunpack.c.l.b16 %v606
          %v741 = vunpack.c.h.b16 %v606
          %v742 = vunpack.c.l.b16 %v607
          %v743 = vunpack.c.h.b16 %v607
          %v744 = vunpack.c.l.b16 %v608
          %v745 = vunpack.c.h.b16 %v608
          %v746 = vunpack.c.l.b16 %v609
          %v747 = vunpack.c.h.b16 %v609
          %v748 = vunpack.c.l.b16 %v610
          %v749 = vunpack.c.h.b16 %v610
          %v750 = vunpack.c.l.b16 %v611
          %v751 = vunpack.c.h.b16 %v611
          %v752 = vunpack.c.l.b16 %v612
          %v753 = vunpack.c.h.b16 %v612
          %v754 = vunpack.c.l.b16 %v613
          %v755 = vunpack.c.h.b16 %v613
          %v756 = vunpack.c.l.b16 %v614
          %v757 = vunpack.c.h.b16 %v614
          %v758 = vunpack.c.l.b16 %v615
          %v759 = vunpack.c.h.b16 %v615
          %v760 = vunpack.c.l.b16 %v616
          %v761 = vunpack.c.h.b16 %v616
          %v762 = vunpack.c.l.b16 %v617
          %v763 = vunpack.c.h.b16 %v617
          %v764 = vunpack.c.l.b16 %v618
          %v765 = vunpack.c.h.b16 %v618
          %v766 = vunpack.c.l.b16 %v619
          %v767 = vunpack.c.h.b16 %v619
          %v768 = vunpack.c.l.b16 %v620
          %v769 = vunpack.c.h.b16 %v620
          %v770 = vunpack.c.l.b16 %v621
          %v771 = vunpack.c.h.b16 %v621
          %v772 = vunpack.c.l.b16 %v622
          %v773 = vunpack.c.h.b16 %v622
          %v774 = vunpack.c.l.b16 %v623
          %v775 = vunpack.c.h.b16 %v623
          %v776 = vunpack.c.l.b16 %v624
          %v777 = vunpack.c.h.b16 %v624
          %v778 = vunpack.c.l.b16 %v625
          %v779 = vunpack.c.h.b16 %v625
          %v780 = vunpack.c.l.b16 %v626
          %v781 = vunpack.c.h.b16 %v626
          %v782 = vunpack.c.l.b16 %v627
          %v783 = vunpack.c.h.b16 %v627
          %v784 = vunpack.c.l.b16 %v628
          %v785 = vunpack.c.h.b16 %v628
          %v786 = vunpack.c.l.b16 %v629
          %v787 = vunpack.c.h.b16 %v629
          %v788 = vunpack.c.l.b16 %v630
          %v789 = vunpack.c.h.b16 %v630
          %v790 = vunpack.c.l.b16 %v631
          %v791 = vunpack.c.h.b16 %v631
          %v792 = vunpack.c.l.b16 %v632
          %v793 = vunpack.c.h.b16 %v632
          %v794 = vunpack.c.l.b16 %v633
          %v795 = vunpack.c.h.b16 %v633
          %v796 = vunpack.c.l.b16 %v634
          %v797 = vunpack.c.h.b16 %v634
          %v798 = vunpack.c.l.b16 %v635
          %v799 = vunpack.c.h.b16 %v635
          %v800 = vunpack.c.l.b16 %v636
          %v801 = vunpack.c.h.b16 %v636
          %v802 = vunpack.c.l.b16 %v637
          %v803 = vunpack.c.h.b16 %v637
          %v804 = vunpack.c.l.b16 %v638
          %v805 = vunpack.c.h.b16 %v638
          %v806 = vunpack.c.l.b16 %v639
          %v807 = vunpack.c.h.b16 %v639
          %v808 = vunpack.c.l.b16 %v640
          %v809 = vunpack.c.h.b16 %v640
          %v810 = vunpack.c.l.b16 %v641
          %v811 = vunpack.c.h.b16 %v641
          %v812 = vunpack.c.l.b16 %v642
          %v813 = vunpack.c.h.b16 %v642
          %v814 = vunpack.c.l.b16 %v643
          %v815 = vunpack.c.h.b16 %v643
          %v816 = vunpack.c.l.b16 %v644
          %v817 = vunpack.c.h.b16 %v644
          %v818 = vunpack.c.l.b16 %v645
          %v819 = vunpack.c.h.b16 %v645
          %v820 = vunpack.c.l.b16 %v646
          %v821 = vunpack.c.h.b16 %v646
          %v822 = vunpack.c.l.b16 %v647
          %v823 = vunpack.c.h.b16 %v647
          %v824 = vunpack.c.l.b16 %v648
          %v825 = vunpack.c.h.b16 %v648
          %v826 = vunpack.c.l.b16 %v649
          %v827 = vunpack.c.h.b16 %v649
          %v828 = vunpack.c.l.b16 %v650
          %v829 = vunpack.c.h.b16 %v650
          %v830 = vunpack.c.l.b16 %v651
          %v831 = vunpack.c.h.b16 %v651
          %v832 = vunpack.c.l.b16 %v652
          %v833 = vunpack.c.h.b16 %v652
          %v834 = vunpack.c.l.b16 %v653
          %v835 = vunpack.c.h.b16 %v653
          %v836 = vunpack.c.l.b16 %v654
          %v837 = vunpack.c.h.b16 %v654
          %v838 = vunpack.c.l.b16 %v655
          %v839 = vunpack.c.h.b16 %v655
          %v840 = vunpack.c.l.b16 %v656
          %v841 = vunpack.c.h.b16 %v656
          %v842 = vunpack.c.l.b16 %v657
          %v843 = vunpack.c.h.b16 %v657
          %v844 = vunpack.c.l.b16 %v658
          %v845 = vunpack.c.h.b16 %v658
          %v846 = vunpack.c.l.b16 %v659
          %v847 = vunpack.c.h.b16 %v659
          %v848 = vunpack.c.l.b16 %v660
          %v849 = vunpack.c.h.b16 %v660
          %v850 = vunpack.c.l.b16 %v661
          %v851 = vunpack.c.h.b16 %v661
          %v852 = vunpack.c.l.b16 %v662
          %v853 = vunpack.c.h.b16 %v662
          %v854 = vunpack.c.l.b16 %v663
          %v855 = vunpack.c.h.b16 %v663
          %v856 = vunpack.c.l.b16 %v664
          %v857 = vunpack.c.h.b16 %v664
          %v858 = vpack.c.b16 %v734, %v730
          %v859 = vpack.c.b16 %v735, %v731
          %v860 = vpack.c.b16 %v736, %v732
          %v861 = vpack.c.b16 %v737, %v733
          %v862 = vpack.c.b16 %v742, %v738
          %v863 = vpack.c.b16 %v743, %v739
          %v864 = vpack.c.b16 %v744, %v740
          %v865 = vpack.c.b16 %v745, %v741
          %v866 = vpack.c.b16 %v750, %v746
          %v867 = vpack.c.b16 %v751, %v747
          %v868 = vpack.c.b16 %v752, %v748
          %v869 = vpack.c.b16 %v753, %v749
          %v870 = vpack.c.b16 %v758, %v754
          %v871 = vpack.c.b16 %v759, %v755
          %v872 = vpack.c.b16 %v760, %v756
          %v873 = vpack.c.b16 %v761, %v757
          %v874 = vpack.c.b16 %v766, %v762
          %v875 = vpack.c.b16 %v767, %v763
          %v876 = vpack.c.b16 %v768, %v764
          %v877 = vpack.c.b16 %v769, %v765
          %v878 = vpack.c.b16 %v774, %v770
          %v879 = vpack.c.b16 %v775, %v771
          %v880 = vpack.c.b16 %v776, %v772
          %v881 = vpack.c.b16 %v777, %v773
          %v882 = vpack.c.b16 %v782, %v778
          %v883 = vpack.c.b16 %v783, %v779
          %v884 = vpack.c.b16 %v784, %v780
          %v885 = vpack.c.b16 %v785, %v781
          %v886 = vpack.c.b16 %v790, %v786
          %v887 = vpack.c.b16 %v791, %v787
          %v888 = vpack.c.b16 %v792, %v788
          %v889 = vpack.c.b16 %v793, %v789
          %v890 = vpack.c.b16 %v798, %v794
          %v891 = vpack.c.b16 %v799, %v795
          %v892 = vpack.c.b16 %v800, %v796
          %v893 = vpack.c.b16 %v801, %v797
          %v894 = vpack.c.b16 %v806, %v802
          %v895 = vpack.c.b16 %v807, %v803
          %v896 = vpack.c.b16 %v808, %v804
          %v897 = vpack.c.b16 %v809, %v805
          %v898 = vpack.c.b16 %v814, %v810
          %v899 = vpack.c.b16 %v815, %v811
          %v900 = vpack.c.b16 %v816, %v812
          %v901 = vpack.c.b16 %v817, %v813
          %v902 = vpack.c.b16 %v822, %v818
          %v903 = vpack.c.b16 %v823, %v819
          %v904 = vpack.c.b16 %v824, %v820
          %v905 = vpack.c.b16 %v825, %v821
          %v906 = vpack.c.b16 %v830, %v826
          %v907 = vpack.c.b16 %v831, %v827
          %v908 = vpack.c.b16 %v832, %v828
          %v909 = vpack.c.b16 %v833, %v829
          %v910 = vpack.c.b16 %v838, %v834
          %v911 = vpack.c.b16 %v839, %v835
          %v912 = vpack.c.b16 %v840, %v836
          %v913 = vpack.c.b16 %v841, %v837
          %v914 = vpack.c.b16 %v846, %v842
          %v915 = vpack.c.b16 %v847, %v843
          %v916 = vpack.c.b16 %v848, %v844
          %v917 = vpack.c.b16 %v849, %v845
          %v918 = vpack.c.b16 %v854, %v850
          %v919 = vpack.c.b16 %v855, %v851
          %v920 = vpack.c.b16 %v856, %v852
          %v921 = vpack.c.b16 %v857, %v853
          %v987 = vperm.slane %v665, 0
          %v988 = vperm.slane %v665, 1
          %v989 = vperm.slane %v665, 2
          %v990 = vperm.slane %v665, 3
          %995 = vmatpush.bf16.msra.mxu0 %v886
          %996 = vmatpush.bf16.msra.mxu0 %v882
          %997 = vmatpush.bf16.msra.mxu0 %v878
          %998 = vmatpush.bf16.msra.mxu0 %v874
          %999 = vmatpush.bf16.msra.mxu0 %v870
          %1000 = vmatpush.bf16.msra.mxu0 %v866
          %1001 = vmatpush.bf16.msra.mxu0 %v862
          %1002 = vmatpush.bf16.msra.mxu0 %v858
          %1003 = vmatmul.bf16.gmra.mxu0 %v599
          %v1004 = vpop.f32.mrf.mxu0
          %v1005 = vadd.f32 %v987, %v1004
          %v1006 = vpop.f32.mrf.mxu0
          %1007 = vdwg.mxu0
          %1008 = vmatpush.bf16.msra.mxu0 %v918
          %1009 = vmatpush.bf16.msra.mxu0 %v914
          %1010 = vmatpush.bf16.msra.mxu0 %v910
          %1011 = vmatpush.bf16.msra.mxu0 %v906
          %1012 = vmatpush.bf16.msra.mxu0 %v902
          %1013 = vmatpush.bf16.msra.mxu0 %v898
          %1014 = vmatpush.bf16.msra.mxu0 %v894
          %1015 = vmatpush.bf16.msra.mxu0 %v890
          %1016 = vmatmul.bf16.gmra.mxu0 %v600
          %v1017 = vpop.f32.mrf.mxu0
          %v1018 = vadd.f32 %v1005, %v1017
          %v1019 = vpop.f32.mrf.mxu0
          %1020 = vdwg.mxu0
          %1021 = vmatpush.bf16.msra.mxu0 %v887
          %1022 = vmatpush.bf16.msra.mxu0 %v883
          %1023 = vmatpush.bf16.msra.mxu0 %v879
          %1024 = vmatpush.bf16.msra.mxu0 %v875
          %1025 = vmatpush.bf16.msra.mxu0 %v871
          %1026 = vmatpush.bf16.msra.mxu0 %v867
          %1027 = vmatpush.bf16.msra.mxu0 %v863
          %1028 = vmatpush.bf16.msra.mxu0 %v859
          %1029 = vmatmul.bf16.gmra.mxu0 %v599
          %v1030 = vpop.f32.mrf.mxu0
          %v1031 = vadd.f32 %v988, %v1030
          %v1032 = vpop.f32.mrf.mxu0
          %1033 = vdwg.mxu0
          %1034 = vmatpush.bf16.msra.mxu0 %v919
          %1035 = vmatpush.bf16.msra.mxu0 %v915
          %1036 = vmatpush.bf16.msra.mxu0 %v911
          %1037 = vmatpush.bf16.msra.mxu0 %v907
          %1038 = vmatpush.bf16.msra.mxu0 %v903
          %1039 = vmatpush.bf16.msra.mxu0 %v899
          %1040 = vmatpush.bf16.msra.mxu0 %v895
          %1041 = vmatpush.bf16.msra.mxu0 %v891
          %1042 = vmatmul.bf16.gmra.mxu0 %v600
          %v1043 = vpop.f32.mrf.mxu0
          %v1044 = vadd.f32 %v1031, %v1043
          %v1045 = vpop.f32.mrf.mxu0
          %1046 = vdwg.mxu0
          %1047 = vmatpush.bf16.msra.mxu0 %v888
          %1048 = vmatpush.bf16.msra.mxu0 %v884
          %1049 = vmatpush.bf16.msra.mxu0 %v880
          %1050 = vmatpush.bf16.msra.mxu0 %v876
          %1051 = vmatpush.bf16.msra.mxu0 %v872
          %1052 = vmatpush.bf16.msra.mxu0 %v868
          %1053 = vmatpush.bf16.msra.mxu0 %v864
          %1054 = vmatpush.bf16.msra.mxu0 %v860
          %1055 = vmatmul.bf16.gmra.mxu0 %v599
          %v1056 = vpop.f32.mrf.mxu0
          %v1057 = vadd.f32 %v989, %v1056
          %v1058 = vpop.f32.mrf.mxu0
          %1059 = vdwg.mxu0
          %1060 = vmatpush.bf16.msra.mxu0 %v920
          %1061 = vmatpush.bf16.msra.mxu0 %v916
          %1062 = vmatpush.bf16.msra.mxu0 %v912
          %1063 = vmatpush.bf16.msra.mxu0 %v908
          %1064 = vmatpush.bf16.msra.mxu0 %v904
          %1065 = vmatpush.bf16.msra.mxu0 %v900
          %1066 = vmatpush.bf16.msra.mxu0 %v896
          %1067 = vmatpush.bf16.msra.mxu0 %v892
          %1068 = vmatmul.bf16.gmra.mxu0 %v600
          %v1069 = vpop.f32.mrf.mxu0
          %v1070 = vadd.f32 %v1057, %v1069
          %v1071 = vpop.f32.mrf.mxu0
          %1072 = vdwg.mxu0
          %1073 = vmatpush.bf16.msra.mxu0 %v889
          %1074 = vmatpush.bf16.msra.mxu0 %v885
          %1075 = vmatpush.bf16.msra.mxu0 %v881
          %1076 = vmatpush.bf16.msra.mxu0 %v877
          %1077 = vmatpush.bf16.msra.mxu0 %v873
          %1078 = vmatpush.bf16.msra.mxu0 %v869
          %1079 = vmatpush.bf16.msra.mxu0 %v865
          %1080 = vmatpush.bf16.msra.mxu0 %v861
          %1081 = vmatmul.bf16.gmra.mxu0 %v599
          %v1082 = vpop.f32.mrf.mxu0
          %v1083 = vadd.f32 %v990, %v1082
          %v1084 = vpop.f32.mrf.mxu0
          %1085 = vdwg.mxu0
          %1086 = vmatpush.bf16.msra.mxu0 %v921
          %1087 = vmatpush.bf16.msra.mxu0 %v917
          %1088 = vmatpush.bf16.msra.mxu0 %v913
          %1089 = vmatpush.bf16.msra.mxu0 %v909
          %1090 = vmatpush.bf16.msra.mxu0 %v905
          %1091 = vmatpush.bf16.msra.mxu0 %v901
          %1092 = vmatpush.bf16.msra.mxu0 %v897
          %1093 = vmatpush.bf16.msra.mxu0 %v893
          %1094 = vmatmul.bf16.gmra.mxu0 %v600
          %v1095 = vpop.f32.mrf.mxu0
          %v1096 = vadd.f32 %v1083, %v1095
          %v1097 = vpop.f32.mrf.mxu0
          %1098 = vdwg.mxu0
          %v1099 = vxor.u32 %v1018, 2147483648
          %v1100 = vmul.f32 %v1099, 1.442695
          %v1101 = vpow.pop %v1100
          %v1102 = vadd.f32 %v1101, 1.0
          %v1103 = vrcp.pop %v1102
          %v1104 = vmul.f32 %v1102, %v1103
          %v1105 = vsub.f32 1.0, %v1104
          %v1106 = vmul.f32 %v1103, %v1105
          %v1107 = vadd.f32 %v1103, %v1106
          %vm1108 = vweird.f32 %v1102
          %vm1109 = vweird.f32 %v1103
          %vm1110 = vmor %vm1108, %vm1109
          %v1111 = vsel %vm1110, %v1103, %v1107
          %v1112 = vand.u32 2147483647, %v1102
          %vm1113 = vcmp.eq.f32.partialorder %v1112, 8.507059e+37
          %v1114 = vand.u32 %v1102, 2147483648
          %v1115 = vor.u32 1.1754944e-38, %v1114
          %v1116 = vsel %vm1113, %v1115, %v1111
          %v1117 = vmul.f32 1.0, %v1116
          %v1118 = vxor.u32 %v1044, 2147483648
          %v1119 = vmul.f32 %v1118, 1.442695
          %v1120 = vpow.pop %v1119
          %v1121 = vadd.f32 %v1120, 1.0
          %v1122 = vrcp.pop %v1121
          %v1123 = vmul.f32 %v1121, %v1122
          %v1124 = vsub.f32 1.0, %v1123
          %v1125 = vmul.f32 %v1122, %v1124
          %v1126 = vadd.f32 %v1122, %v1125
          %vm1127 = vweird.f32 %v1121
          %vm1128 = vweird.f32 %v1122
          %vm1129 = vmor %vm1127, %vm1128
          %v1130 = vsel %vm1129, %v1122, %v1126
          %v1131 = vand.u32 2147483647, %v1121
          %vm1132 = vcmp.eq.f32.partialorder %v1131, 8.507059e+37
          %v1133 = vand.u32 %v1121, 2147483648
          %v1134 = vor.u32 1.1754944e-38, %v1133
          %v1135 = vsel %vm1132, %v1134, %v1130
          %v1136 = vmul.f32 1.0, %v1135
          %v1137 = vtanh.pop %v1070
          %v1138 = vxor.u32 %v1096, 2147483648
          %v1139 = vmul.f32 %v1138, 1.442695
          %v1140 = vpow.pop %v1139
          %v1141 = vadd.f32 %v1140, 1.0
          %v1142 = vrcp.pop %v1141
          %v1143 = vmul.f32 %v1141, %v1142
          %v1144 = vsub.f32 1.0, %v1143
          %v1145 = vmul.f32 %v1142, %v1144
          %v1146 = vadd.f32 %v1142, %v1145
          %vm1147 = vweird.f32 %v1141
          %vm1148 = vweird.f32 %v1142
          %vm1149 = vmor %vm1147, %vm1148
          %v1150 = vsel %vm1149, %v1142, %v1146
          %v1151 = vand.u32 2147483647, %v1141
          %vm1152 = vcmp.eq.f32.partialorder %v1151, 8.507059e+37
          %v1153 = vand.u32 %v1141, 2147483648
          %v1154 = vor.u32 1.1754944e-38, %v1153
          %v1155 = vsel %vm1152, %v1154, %v1150
          %v1156 = vmul.f32 1.0, %v1155
          %v1157 = vmul.f32 %v1136, %v586
          %v1158 = vmul.f32 %v1117, %v1137
          %v1159 = vadd.f32 %v1157, %v1158
          %v1160 = vtanh.pop %v1159
          %v1161 = vmul.f32 %v1156, %v1160
          %1162 = vst [vmem:[%s507] sm:$0x1] %v1161
          %1163 = vst [vmem:[%s513] sm:$0x1] %v1159
          %1164 = vst.msk [vmem:[#allocation2] sm:$0x1] %vm591, %v1161
        $region60: #{decoder_rnn_forward.1} parent=47 // pred_fallthru
          _
        %p1165 = scmp.ge.s32.totalorder %s30, 4
        // Predicated region
        $region61: #{decoder_rnn_forward.1} parent=47 // pred_check
          %p1166 = pneg %p1165
        $region62: #{decoder_rnn_forward.1} parent=47 // pred_check_branch
          %1168 = sbr.rel (%p1166) target = $region64
        $region63: #{decoder_rnn_forward.1} parent=47 // pred_region
          %s1169 = ssub.s32 %s30, 4
          %v1170 = vld [vmem:[#allocation2] sm:$0x1]
          %v1171 = vpack.c.bf16 %v1170, %v1170
          %v1172 = vld [vmem:[%s550] sm:$0xff]
          %v1173 = vld [vmem:[%s550 + $0x8] sm:$0xff]
          %v1174 = vld [vmem:[%s550 + $0x10] sm:$0xff]
          %v1175 = vld [vmem:[%s550 + $0x18] sm:$0xff]
          %v1176 = vld [vmem:[%s550 + $0x20] sm:$0xff]
          %v1177 = vld [vmem:[%s550 + $0x28] sm:$0xff]
          %v1178 = vld [vmem:[%s550 + $0x30] sm:$0xff]
          %v1179 = vld [vmem:[%s550 + $0x38] sm:$0xff]
          %v1180 = vld [vmem:[%s550 + $0x40] sm:$0xff]
          %v1181 = vld [vmem:[%s550 + $0x48] sm:$0xff]
          %v1182 = vld [vmem:[%s550 + $0x50] sm:$0xff]
          %v1183 = vld [vmem:[%s550 + $0x58] sm:$0xff]
          %v1184 = vld [vmem:[%s550 + $0x60] sm:$0xff]
          %v1185 = vld [vmem:[%s550 + $0x68] sm:$0xff]
          %v1186 = vld [vmem:[%s550 + $0x70] sm:$0xff]
          %v1187 = vld [vmem:[%s550 + $0x78] sm:$0xff]
          %v1188 = vld [vmem:[%s561] sm:$0x3]
          %v1205 = vunpack.c.l.b16 %v1172
          %v1206 = vunpack.c.h.b16 %v1172
          %v1207 = vunpack.c.l.b16 %v1173
          %v1208 = vunpack.c.h.b16 %v1173
          %v1209 = vunpack.c.l.b16 %v1174
          %v1210 = vunpack.c.h.b16 %v1174
          %v1211 = vunpack.c.l.b16 %v1175
          %v1212 = vunpack.c.h.b16 %v1175
          %v1213 = vunpack.c.l.b16 %v1176
          %v1214 = vunpack.c.h.b16 %v1176
          %v1215 = vunpack.c.l.b16 %v1177
          %v1216 = vunpack.c.h.b16 %v1177
          %v1217 = vunpack.c.l.b16 %v1178
          %v1218 = vunpack.c.h.b16 %v1178
          %v1219 = vunpack.c.l.b16 %v1179
          %v1220 = vunpack.c.h.b16 %v1179
          %v1221 = vunpack.c.l.b16 %v1180
          %v1222 = vunpack.c.h.b16 %v1180
          %v1223 = vunpack.c.l.b16 %v1181
          %v1224 = vunpack.c.h.b16 %v1181
          %v1225 = vunpack.c.l.b16 %v1182
          %v1226 = vunpack.c.h.b16 %v1182
          %v1227 = vunpack.c.l.b16 %v1183
          %v1228 = vunpack.c.h.b16 %v1183
          %v1229 = vunpack.c.l.b16 %v1184
          %v1230 = vunpack.c.h.b16 %v1184
          %v1231 = vunpack.c.l.b16 %v1185
          %v1232 = vunpack.c.h.b16 %v1185
          %v1233 = vunpack.c.l.b16 %v1186
          %v1234 = vunpack.c.h.b16 %v1186
          %v1235 = vunpack.c.l.b16 %v1187
          %v1236 = vunpack.c.h.b16 %v1187
          %v1237 = vpack.c.b16 %v1207, %v1205
          %v1238 = vpack.c.b16 %v1208, %v1206
          %v1239 = vpack.c.b16 %v1211, %v1209
          %v1240 = vpack.c.b16 %v1212, %v1210
          %v1241 = vpack.c.b16 %v1215, %v1213
          %v1242 = vpack.c.b16 %v1216, %v1214
          %v1243 = vpack.c.b16 %v1219, %v1217
          %v1244 = vpack.c.b16 %v1220, %v1218
          %v1245 = vpack.c.b16 %v1223, %v1221
          %v1246 = vpack.c.b16 %v1224, %v1222
          %v1247 = vpack.c.b16 %v1227, %v1225
          %v1248 = vpack.c.b16 %v1228, %v1226
          %v1249 = vpack.c.b16 %v1231, %v1229
          %v1250 = vpack.c.b16 %v1232, %v1230
          %v1251 = vpack.c.b16 %v1235, %v1233
          %v1252 = vpack.c.b16 %v1236, %v1234
          %v1270 = vperm.slane %v1188, 0
          %v1271 = vperm.slane %v1188, 1
          %1274 = vmatpush.bf16.msra.mxu0 %v1251
          %1275 = vmatpush.bf16.msra.mxu0 %v1249
          %1276 = vmatpush.bf16.msra.mxu0 %v1247
          %1277 = vmatpush.bf16.msra.mxu0 %v1245
          %1278 = vmatpush.bf16.msra.mxu0 %v1243
          %1279 = vmatpush.bf16.msra.mxu0 %v1241
          %1280 = vmatpush.bf16.msra.mxu0 %v1239
          %1281 = vmatpush.bf16.msra.mxu0 %v1237
          %1282 = vmatmul.bf16.gmra.mxu0 %v1171
          %v1283 = vpop.f32.mrf.mxu0
          %v1284 = vadd.f32 %v1270, %v1283
          %v1285 = vpop.f32.mrf.mxu0
          %1286 = vdwg.mxu0
          %1287 = vmatpush.bf16.msra.mxu0 %v1252
          %1288 = vmatpush.bf16.msra.mxu0 %v1250
          %1289 = vmatpush.bf16.msra.mxu0 %v1248
          %1290 = vmatpush.bf16.msra.mxu0 %v1246
          %1291 = vmatpush.bf16.msra.mxu0 %v1244
          %1292 = vmatpush.bf16.msra.mxu0 %v1242
          %1293 = vmatpush.bf16.msra.mxu0 %v1240
          %1294 = vmatpush.bf16.msra.mxu0 %v1238
          %1295 = vmatmul.bf16.gmra.mxu0 %v1171
          %v1296 = vpop.f32.mrf.mxu0
          %v1297 = vadd.f32 %v1271, %v1296
          %v1298 = vpop.f32.mrf.mxu0
          %1299 = vdwg.mxu0
          %s1300 = smul.u32 %s1169, 256
          %v1303 = vrot.slane %v1297, 7
          %vm1304 = vcmask 1040384
          %v1305 = vsel %vm1304, %v1284, %v1303
          %s1307 = sshra.s32 %s1300, 7
          %s1308 = sand.u32 %s1300, 127
          %s1309 = scalar_lea.vmem [#allocation3], %s1307
          %v1310 = vlaneseq
          %vm1311 = vcmp.ge.s32.totalorder %v1310, 0
          %vm1312 = vcmp.lt.s32.totalorder %v1310, 256
          %vm1313 = vmand %vm1311, %vm1312
          %1314 = vst.msk [vmem:[%s1309] sm:$0x3] %vm1313, %v1305
        $region64: #{decoder_rnn_forward.1} parent=47 // pred_fallthru
          _
        %p1315 = scmp.eq.s32.totalorder %s30, 4
        // Predicated region
        $region65: #{decoder_rnn_forward.1} parent=47 // pred_check
          %p1316 = pneg %p1315
        $region66: #{decoder_rnn_forward.1} parent=47 // pred_check_branch
          %1318 = sbr.rel (%p1316) target = $region68
        $region67: #{decoder_rnn_forward.1} parent=47 // pred_region
          %v1319 = vld [vmem:[#allocation3] sm:$0x3]
          %v1321 = vperm.slane %v1319, 0
          %v1322 = vperm.slane %v1319, 1
          %vm1325 = vcmask 1040384
          %v1326 = vsel %vm1325, %v1321, -inf
          %v1327 = vsel %vm1325, %v1322, -inf
          %v1328 = vmax.f32 %v1326, %v1327
          %1329 = vmax.xlane.f32.xlu0 %v1328
          %v1330 = vpop.xlane.xlu0 %1329
          %v1332 = vperm.slane %v1330, 0
          %v1334 = vsub.f32 %v1319, %v1332
          %v1335 = vmul.f32 %v1334, 1.442695
          %v1336 = vpow.pop %v1335
          %v1338 = vperm.slane %v1336, 0
          %v1339 = vperm.slane %v1336, 1
          %v1342 = vsel %vm1325, %v1338, 0.0
          %v1343 = vsel %vm1325, %v1339, 0.0
          %v1344 = vadd.f32 %v1342, %v1343
          %1345 = vadd.xlane.f32.xlu0 %v1344
          %v1346 = vpop.xlane.xlu0 %1345
          %v1347 = vlog2.pop %v1346
          %v1348 = vmul.f32 %v1347, 0.6931472
          %v1350 = vperm.slane %v1348, 0
          %v1352 = vsub.f32 %v1334, %v1350
          %v1353 = vlaneseq
          %vm1354 = vcmp.ge.s32.totalorder %v1353, 0
          %vm1355 = vcmp.lt.s32.totalorder %v1353, 256
          %vm1356 = vmand %vm1354, %vm1355
          %1357 = vst.msk [vmem:[#allocation9] sm:$0x3] %vm1356, %v1352
        $region68: #{decoder_rnn_forward.1} parent=47 // pred_fallthru
          _
        %s1358 = sand.u32 %s30, 1
        %s1359 = scalar_lea.sflag [#allocation11], %s1358
        %s1360 = sand.u32 %s275, 1
        %s1361 = scalar_lea.vmem [#allocation10], %s1360
        %s1362 = sand.u32 %s30, 1
        %s1363 = scalar_lea.sflag [#allocation11], %s1362
        %s1364 = sand.u32 %s305, 1
        %s1365 = scalar_lea.vmem [#allocation12], %s1364
        // Predicated region
        $region69: #{decoder_rnn_forward.1} parent=47 // pred_check
          %p1366 = pneg %p255
        $region70: #{decoder_rnn_forward.1} parent=47 // pred_check_branch
          %1368 = sbr.rel (%p1366) target = $region72
        $region71: #{decoder_rnn_forward.1} parent=47 // pred_region
          %1370 = vsyncadd [#allocation8], 0
          %s1372 = sshll.u32 [#allocation9], 4
          %s1373 = int_to_ptr.vmem [resolvable:$true] %s1372
          %s1374 = sshll.u32 %s8, 4
          %s1375 = int_to_ptr.hbm [resolvable:$true] %s1374
          %1377 = dma.vmem_to_hbm [thread:$0]  %s1373, 32, %s1375, [#allocation8]
        $region72: #{decoder_rnn_forward.1} parent=47 // pred_fallthru
          _
        // Predicated region
        $region73: #{decoder_rnn_forward.1} parent=47 // pred_check
          %p1378 = pneg %p285
        $region74: #{decoder_rnn_forward.1} parent=47 // pred_check_branch
          %1380 = sbr.rel (%p1378) target = $region76
        $region75: #{decoder_rnn_forward.1} parent=47 // pred_region
          %p1381 = scmp.lt.s32.totalorder %s30, 3
          %s1382 = scalar_select %p1381, %s30, 3
          %1384 = vsyncadd %s1359, 0
          %s1385 = scalar_lea.hbm %s9, %s1382
          %s1387 = sshll.u32 %s1361, 4
          %s1388 = int_to_ptr.vmem [resolvable:$true] %s1387
          %s1389 = sshll.u32 %s1385, 4
          %s1390 = int_to_ptr.hbm [resolvable:$true] %s1389
          %1392 = dma.vmem_to_hbm [thread:$0]  %s1388, 16, %s1390, %s1359
        $region76: #{decoder_rnn_forward.1} parent=47 // pred_fallthru
          _
        // Predicated region
        $region77: #{decoder_rnn_forward.1} parent=47 // pred_check
          %p1393 = pneg %p315
        $region78: #{decoder_rnn_forward.1} parent=47 // pred_check_branch
          %1395 = sbr.rel (%p1393) target = $region80
        $region79: #{decoder_rnn_forward.1} parent=47 // pred_region
          %p1396 = scmp.lt.s32.totalorder %s30, 3
          %s1397 = scalar_select %p1396, %s30, 3
          %1399 = vsyncadd %s1363, 0
          %s1400 = scalar_lea.hbm %s10, %s1397
          %s1402 = sshll.u32 %s1365, 4
          %s1403 = int_to_ptr.vmem [resolvable:$true] %s1402
          %s1404 = sshll.u32 %s1400, 4
          %s1405 = int_to_ptr.hbm [resolvable:$true] %s1404
          %1407 = dma.vmem_to_hbm [thread:$0]  %s1403, 16, %s1405, %s1363
        $region80: #{decoder_rnn_forward.1} parent=47 // pred_fallthru
          _
        // Predicated region
        $region81: #{decoder_rnn_forward.1} parent=47 // pred_check
          %p1408 = pneg %p255
        $region82: #{decoder_rnn_forward.1} parent=47 // pred_check_branch
          %1410 = sbr.rel (%p1408) target = $region84
        $region83: #{decoder_rnn_forward.1} parent=47 // pred_region
          %1412 = dma.done [#allocation8], 32
        $region84: #{decoder_rnn_forward.1} parent=47 // pred_fallthru
          _
      $region48: #{decoder_rnn_forward.1} parent=5 // pred_fallthru
        _
      %p1413 = scmp.le.s32.totalorder 2, %s25
      // Predicated region
      $region85: #{decoder_rnn_forward.1} parent=5 // pred_check
        %p1414 = pneg %p1413
      $region86: #{decoder_rnn_forward.1} parent=5 // pred_check_branch
        %1416 = sbr.rel (%p1414) target = $region88
      $region87: #{decoder_rnn_forward.1} parent=5 // pred_region
        %s1417 = ssub.s32 %s25, 2
        // Predicated region
        $region89: #{decoder_rnn_forward.1} parent=87 // pred_check
          %p1418 = pneg %p291
        $region90: #{decoder_rnn_forward.1} parent=87 // pred_check_branch
          %1420 = sbr.rel (%p1418) target = $region92
        $region91: #{decoder_rnn_forward.1} parent=87 // pred_region
          %s1421 = sand.u32 %s31, 1
          %s1422 = scalar_lea.sflag [#allocation11], %s1421
          %s1423 = sand.u32 %s276, 1
          %s1424 = scalar_lea.vmem [#allocation10], %s1423
          %1426 = dma.done %s1422, 16
        $region92: #{decoder_rnn_forward.1} parent=87 // pred_fallthru
          _
        // Predicated region
        $region93: #{decoder_rnn_forward.1} parent=87 // pred_check
          %p1427 = pneg %p321
        $region94: #{decoder_rnn_forward.1} parent=87 // pred_check_branch
          %1429 = sbr.rel (%p1427) target = $region96
        $region95: #{decoder_rnn_forward.1} parent=87 // pred_region
          %s1430 = sand.u32 %s31, 1
          %s1431 = scalar_lea.sflag [#allocation11], %s1430
          %s1432 = sand.u32 %s306, 1
          %s1433 = scalar_lea.vmem [#allocation12], %s1432
          %1435 = dma.done %s1431, 16
        $region96: #{decoder_rnn_forward.1} parent=87 // pred_fallthru
          _
      $region88: #{decoder_rnn_forward.1} parent=5 // pred_fallthru
        _
    $region6: #{decoder_rnn_forward.1} parent=1 // loop_footer
      %s29 = sadd.s32 1, %s25
    $region7: #{decoder_rnn_forward.1} parent=1 // loop_footer_branch
      %24 = sbr.rel target = $region3
    $region8: #{decoder_rnn_forward.1} parent=1 // loop_exit
      _
    %1436 = vsyncpa [#allocation7], 1
    %s1437 = scalar_lea.sflag [#allocation7], 1
    %1438 = vsyncpa %s1437, 1
    %1439 = vsyncpa [#allocation8], 1
    %s1440 = scalar_lea.sflag [#allocation8], 1
    %1441 = vsyncpa %s1440, 1
    %1442 = vsyncpa [#allocation11], 1
    %s1443 = scalar_lea.sflag [#allocation11], 1
    %1444 = vsyncpa %s1443, 1

</llo_original>
